<compile_context>
chip_gen: v7x
topology: tpu7x:2x2x1
jax: 0.10.0
libtpu: 0.0.40
codegen_flags: <defaults>
</compile_context>

<pallas_src>
import functools

import jax
import jax.numpy as jnp
from jax.experimental import pallas as pl
from jax.experimental.pallas import tpu as pltpu


def _rup(v, m):
    return (v + m - 1) // m * m


# ----------------------------------------------------------------------------
# Kernel: grid=(1,), refs = (x, weight_slab, out).  Everything else in vregs.
# ----------------------------------------------------------------------------
def _fused_lstm_kernel(x_ref, w_ref, out_ref, *, seq_len, batch, in_dim,
                       hidden, num_layers, out_pad,
                       off_rec, off_bias, off_wout, off_bout):
    S, B, H, L = seq_len, batch, hidden, num_layers
    G = 4 * H

    # ---- unpack the packed parameter slab (static slices) -------------------
    w_ih0 = w_ref[pl.ds(0, in_dim), :][:, :G]           # (in_dim, 4H)
    w_rec = w_ref[pl.ds(off_rec, L * H), :]             # (L*H, L*4H) block matrix
    bias = w_ref[pl.ds(off_bias, 1), :]                 # (1, L*4H), b_ih + b_hh

    # ---- hoisted layer-0 input projection, ALL timesteps in one matmul ------
    gates0 = jnp.dot(x_ref[...], w_ih0,
                     preferred_element_type=jnp.float32)  # (S*B, 4H), in vregs

    h = [jnp.zeros((B, H), jnp.float32) for _ in range(L)]
    c = [jnp.zeros((B, H), jnp.float32) for _ in range(L)]
    outs = []

    # ---- wavefront: super-step s advances layer l to timestep s - l ---------
    for s in range(S + L - 1):
        if s == 0:
            # All h are zero -> recurrent/block term vanishes; skip the matmul.
            g_all = bias + jnp.zeros((B, L * G), jnp.float32)
        else:
            lhs = h[0] if L == 1 else jnp.concatenate(h, axis=1)   # (B, L*H)
            g_all = jnp.dot(lhs, w_rec,
                            preferred_element_type=jnp.float32) + bias

        new_h, new_c = list(h), list(c)
        for l in range(L):
            t = s - l
            if t < 0 or t >= S:
                continue                                  # layer idle this step
            g = g_all[:, l * G:(l + 1) * G]               # (B, 4H)
            if l == 0:
                g = g + gates0[t * B:(t + 1) * B, :]      # hoisted x @ W_ih0
            # Whole-(B,4H) sigmoid/tanh, then 32-lane gate slices [i, f, g, o].
            sg = jax.nn.sigmoid(g)
            th = jnp.tanh(g)
            i_g = sg[:, 0 * H:1 * H]
            f_g = sg[:, 1 * H:2 * H]
            g_g = th[:, 2 * H:3 * H]
            o_g = sg[:, 3 * H:4 * H]
            cc = f_g * c[l] + i_g * g_g
            hh = o_g * jnp.tanh(cc)
            new_c[l], new_h[l] = cc, hh
            if l == L - 1:                                # collected in t-order
                outs.append(hh)
        h, c = new_h, new_c

    # ---- fused Linear head; lane-dense (out_pad=128) unmasked store ---------
    hs = jnp.concatenate(outs, axis=0)                    # (S*B, H)
    w_out = w_ref[pl.ds(off_wout, H), :][:, :out_pad]     # (H, out_pad)
    b_out = w_ref[pl.ds(off_bout, 1), :][:, :out_pad]     # (1, out_pad)
    out_ref[...] = jnp.dot(hs, w_out,
                           preferred_element_type=jnp.float32) + b_out


# ----------------------------------------------------------------------------
# Host-side packing of all parameters into one slab + static layout info.
# Slab rows:  [W_ih0^T | W_rec block matrix | bias row | W_out^T | b_out]
# with every segment starting on an 8-row boundary; lane width = L*4H (>=128).
# ----------------------------------------------------------------------------
def pack_params(params, input_size):
    L = len(params["lstm"])
    H = params["lstm"][0]["w_hh_t"].shape[0]
    G = 4 * H
    out_dim = params["reg"]["w_t"].shape[1]
    out_pad = max(128, _rup(out_dim, 128))
    width = max(L * G, out_pad)

    off_rec = _rup(input_size, 8)
    off_bias = off_rec + _rup(L * H, 8)
    off_wout = off_bias + 8
    off_bout = off_wout + _rup(H, 8)
    rows = off_bout + 8

    slab = jnp.zeros((rows, width), jnp.float32)
    # Layer-0 input projection (used for the hoisted x @ W_ih0).
    slab = slab.at[:input_size, :G].set(params["lstm"][0]["w_ih_t"])
    # Block matrix W_rec: column block l gets W_hh_l^T on the diagonal and
    # W_ih_l^T (the inter-layer projection) on the super-diagonal.
    for l, lp in enumerate(params["lstm"]):
        r0 = off_rec + l * H
        slab = slab.at[r0:r0 + H, l * G:(l + 1) * G].set(lp["w_hh_t"])
        if l >= 1:
            slab = slab.at[r0 - H:r0, l * G:(l + 1) * G].set(lp["w_ih_t"])
        slab = slab.at[off_bias, l * G:(l + 1) * G].set(lp["bias"][0])
    # Linear head, zero-padded to out_pad lanes.
    slab = slab.at[off_wout:off_wout + H, :out_dim].set(params["reg"]["w_t"])
    slab = slab.at[off_bout, :out_dim].set(params["reg"]["bias"][0])

    layout = dict(hidden=H, num_layers=L, out_dim=out_dim, out_pad=out_pad,
                  off_rec=off_rec, off_bias=off_bias,
                  off_wout=off_wout, off_bout=off_bout)
    return slab, layout


# ----------------------------------------------------------------------------
# Wrapper: one pallas_call, 2 input DMAs (x, slab), 1 output DMA.
# ----------------------------------------------------------------------------
def lstm_forward(x, w_slab, layout):
    """x: (seq_len, batch, input_size) -> (seq_len, batch, output_size)."""
    S, B, in_dim = x.shape
    H, L = layout["hidden"], layout["num_layers"]
    out_dim, out_pad = layout["out_dim"], layout["out_pad"]

    x2 = x.reshape(S * B, in_dim)                        # free XLA reshape

    kernel = functools.partial(
        _fused_lstm_kernel,
        seq_len=S, batch=B, in_dim=in_dim, hidden=H, num_layers=L,
        out_pad=out_pad, off_rec=layout["off_rec"], off_bias=layout["off_bias"],
        off_wout=layout["off_wout"], off_bout=layout["off_bout"])

    y = pl.pallas_call(
        kernel,
        out_shape=jax.ShapeDtypeStruct((S * B, out_pad), jnp.float32),
        grid=(1,),
        in_specs=[
            pl.BlockSpec((S * B, in_dim), lambda i: (0, 0)),
            pl.BlockSpec(w_slab.shape, lambda i: (0, 0)),
        ],
        out_specs=pl.BlockSpec((S * B, out_pad), lambda i: (0, 0)),
        compiler_params=pltpu.CompilerParams(
            dimension_semantics=("arbitrary",)),
    )(x2, w_slab)
    return y[:, :out_dim].reshape(S, B, out_dim)


# ----------------------------------------------------------------------------
# Parameter init (PyTorch-style uniform(-1/sqrt(H), 1/sqrt(H))), weights
# pre-transposed so the kernel does x @ W directly; b_ih + b_hh pre-summed.
# ----------------------------------------------------------------------------
def init_params(key, input_size, hidden_size, output_size, num_layers):
    params = {"lstm": [], "reg": {}}
    bound = 1.0 / float(hidden_size) ** 0.5
    for layer in range(num_layers):
        in_dim = input_size if layer == 0 else hidden_size
        key, k1, k2, k3, k4 = jax.random.split(key, 5)
        w_ih = jax.random.uniform(k1, (4 * hidden_size, in_dim), jnp.float32,
                                  -bound, bound)
        w_hh = jax.random.uniform(k2, (4 * hidden_size, hidden_size), jnp.float32,
                                  -bound, bound)
        b_ih = jax.random.uniform(k3, (4 * hidden_size,), jnp.float32, -bound, bound)
        b_hh = jax.random.uniform(k4, (4 * hidden_size,), jnp.float32, -bound, bound)
        params["lstm"].append({
            "w_ih_t": jnp.transpose(w_ih),            # (in_dim, 4H)
            "w_hh_t": jnp.transpose(w_hh),            # (H, 4H)
            "bias": (b_ih + b_hh)[None, :],           # (1, 4H)
        })
    key, k1, k2 = jax.random.split(key, 3)
    w = jax.random.uniform(k1, (output_size, hidden_size), jnp.float32, -bound, bound)
    b = jax.random.uniform(k2, (output_size,), jnp.float32, -bound, bound)
    params["reg"] = {"w_t": jnp.transpose(w), "bias": b[None, :]}
    return params


# ----------------------------------------------------------------------------
# Pure-JAX reference (same math) for a correctness check.
# ----------------------------------------------------------------------------
def lstm_reference(x, params):
    seq_len, batch, _ = x.shape
    h_seq = x
    for lp in params["lstm"]:
        H = lp["w_hh_t"].shape[0]

        def step(carry, x_t, lp=lp, H=H):
            h, c = carry
            gates = x_t @ lp["w_ih_t"] + h @ lp["w_hh_t"] + lp["bias"]
            i_g = jax.nn.sigmoid(gates[:, 0 * H:1 * H])
            f_g = jax.nn.sigmoid(gates[:, 1 * H:2 * H])
            g_g = jnp.tanh(gates[:, 2 * H:3 * H])
            o_g = jax.nn.sigmoid(gates[:, 3 * H:4 * H])
            c = f_g * c + i_g * g_g
            h = o_g * jnp.tanh(c)
            return (h, c), h

        init = (jnp.zeros((batch, H), jnp.float32),
                jnp.zeros((batch, H), jnp.float32))
        (_, _), h_seq = jax.lax.scan(step, init, h_seq)
    y = h_seq.reshape(seq_len * batch, -1) @ params["reg"]["w_t"] + params["reg"]["bias"]
    return y.reshape(seq_len, batch, -1)


if __name__ == "__main__":
    SEQ_LEN, BATCH = 8, 8
    INPUT_SIZE, HIDDEN_SIZE, OUTPUT_SIZE, NUM_LAYERS = 16, 32, 8, 2

    key = jax.random.PRNGKey(0)
    key, xk = jax.random.split(key)
    x = jax.random.normal(xk, (SEQ_LEN, BATCH, INPUT_SIZE), jnp.float32)
    params = init_params(key, INPUT_SIZE, HIDDEN_SIZE, OUTPUT_SIZE, NUM_LAYERS)

    w_slab, layout = pack_params(params, INPUT_SIZE)
    fwd = jax.jit(functools.partial(lstm_forward, layout=layout))

    out = fwd(x, w_slab)
    jax.block_until_ready(out)

    assert out.shape == (SEQ_LEN, BATCH, OUTPUT_SIZE)
    assert bool(jnp.all(jnp.isfinite(out)))

    ref = lstm_reference(x, params)
    assert bool(jnp.allclose(out, ref, atol=1e-3, rtol=1e-3)), (
        float(jnp.max(jnp.abs(out - ref))))

    print("KERNEL_OK")
</pallas_src>

<mosaic_0001>
module attributes {stable_mosaic.version = 11 : i64} {
  func.func @_fused_lstm_kernel(%arg0: i32, %arg1: memref<64x16xf32, #tpu.memory_space<vmem>>, %arg2: memref<128x256xf32, #tpu.memory_space<vmem>>, %arg3: memref<64x128xf32, #tpu.memory_space<vmem>>) attributes {dimension_semantics = [#tpu.dimension_semantics<arbitrary>], iteration_bounds = array<i64: 1>, scalar_prefetch = 0 : i64, scratch_operands = 0 : i64, tpu.core_type = #tpu.core_type<tc>, window_params = [{pipeline_mode = #tpu.pipeline_mode<synchronous>, transform_indices = @transform_0, window_bounds = array<i64: 64, 16>}, {pipeline_mode = #tpu.pipeline_mode<synchronous>, transform_indices = @transform_1, window_bounds = array<i64: 128, 256>}, {pipeline_mode = #tpu.pipeline_mode<synchronous>, transform_indices = @transform_2, window_bounds = array<i64: 64, 128>}]} {
    %c0 = arith.constant 0 : index
    %c0_0 = arith.constant 0 : index
    %0 = vector.load %arg2[%c0, %c0_0] : memref<128x256xf32, #tpu.memory_space<vmem>>, vector<16x256xf32>
    %1 = vector.extract_strided_slice %0 {offsets = [0, 0], sizes = [16, 128], strides = [1, 1]} : vector<16x256xf32> to vector<16x128xf32>
    %c16 = arith.constant 16 : index
    %c0_1 = arith.constant 0 : index
    %2 = vector.load %arg2[%c16, %c0_1] : memref<128x256xf32, #tpu.memory_space<vmem>>, vector<64x256xf32>
    %c80 = arith.constant 80 : index
    %c0_2 = arith.constant 0 : index
    %3 = vector.load %arg2[%c80, %c0_2] : memref<128x256xf32, #tpu.memory_space<vmem>>, vector<1x256xf32>
    %c0_3 = arith.constant 0 : index
    %c0_4 = arith.constant 0 : index
    %4 = vector.load %arg1[%c0_3, %c0_4] : memref<64x16xf32, #tpu.memory_space<vmem>>, vector<64x16xf32>
    %cst = arith.constant dense<0.000000e+00> : vector<64x128xf32>
    %5 = tpu.matmul %4, %1, %cst {dimension_numbers = #tpu.dot_dimension_numbers<[1], [0], [0], [1], [0, 0, 1, 1], [], []>} : vector<64x16xf32>, vector<16x128xf32>, vector<64x128xf32> -> vector<64x128xf32>
    %cst_5 = arith.constant 0.000000e+00 : f32
    %6 = vector.broadcast %cst_5 : f32 to vector<8x32xf32>
    %cst_6 = arith.constant 0.000000e+00 : f32
    %7 = vector.broadcast %cst_6 : f32 to vector<8x32xf32>
    %cst_7 = arith.constant 0.000000e+00 : f32
    %8 = vector.broadcast %cst_7 : f32 to vector<8x32xf32>
    %cst_8 = arith.constant 0.000000e+00 : f32
    %9 = vector.broadcast %cst_8 : f32 to vector<8x256xf32>
    %10 = vector.broadcast %3 : vector<1x256xf32> to vector<8x256xf32>
    %11 = arith.addf %10, %9 : vector<8x256xf32>
    %12 = vector.extract_strided_slice %11 {offsets = [0, 0], sizes = [8, 128], strides = [1, 1]} : vector<8x256xf32> to vector<8x128xf32>
    %13 = vector.extract_strided_slice %5 {offsets = [0, 0], sizes = [8, 128], strides = [1, 1]} : vector<64x128xf32> to vector<8x128xf32>
    %14 = arith.addf %12, %13 : vector<8x128xf32>
    %15 = arith.negf %14 : vector<8x128xf32>
    %16 = math.exp %15 : vector<8x128xf32>
    %cst_9 = arith.constant 1.000000e+00 : f32
    %17 = vector.broadcast %cst_9 : f32 to vector<8x128xf32>
    %18 = arith.addf %17, %16 : vector<8x128xf32>
    %19 = arith.divf %17, %18 : vector<8x128xf32>
    %20 = math.tanh %14 : vector<8x128xf32>
    %21 = vector.extract_strided_slice %19 {offsets = [0, 0], sizes = [8, 32], strides = [1, 1]} : vector<8x128xf32> to vector<8x32xf32>
    %22 = vector.extract_strided_slice %19 {offsets = [0, 32], sizes = [8, 32], strides = [1, 1]} : vector<8x128xf32> to vector<8x32xf32>
    %23 = vector.extract_strided_slice %20 {offsets = [0, 64], sizes = [8, 32], strides = [1, 1]} : vector<8x128xf32> to vector<8x32xf32>
    %24 = vector.extract_strided_slice %19 {offsets = [0, 96], sizes = [8, 32], strides = [1, 1]} : vector<8x128xf32> to vector<8x32xf32>
    %25 = arith.mulf %22, %7 : vector<8x32xf32>
    %26 = arith.mulf %21, %23 : vector<8x32xf32>
    %27 = arith.addf %25, %26 : vector<8x32xf32>
    %28 = math.tanh %27 : vector<8x32xf32>
    %29 = arith.mulf %24, %28 : vector<8x32xf32>
    %30 = tpu.concatenate %29, %6 in 1 : vector<8x32xf32>, vector<8x32xf32> -> vector<8x64xf32>
    %cst_10 = arith.constant dense<0.000000e+00> : vector<8x256xf32>
    %31 = tpu.matmul %30, %2, %cst_10 {dimension_numbers = #tpu.dot_dimension_numbers<[1], [0], [0], [1], [0, 0, 1, 1], [], []>} : vector<8x64xf32>, vector<64x256xf32>, vector<8x256xf32> -> vector<8x256xf32>
    %32 = vector.broadcast %3 : vector<1x256xf32> to vector<8x256xf32>
    %33 = arith.addf %31, %32 : vector<8x256xf32>
    %34 = vector.extract_strided_slice %33 {offsets = [0, 0], sizes = [8, 128], strides = [1, 1]} : vector<8x256xf32> to vector<8x128xf32>
    %35 = vector.extract_strided_slice %5 {offsets = [8, 0], sizes = [8, 128], strides = [1, 1]} : vector<64x128xf32> to vector<8x128xf32>
    %36 = arith.addf %34, %35 : vector<8x128xf32>
    %37 = arith.negf %36 : vector<8x128xf32>
    %38 = math.exp %37 : vector<8x128xf32>
    %cst_11 = arith.constant 1.000000e+00 : f32
    %39 = vector.broadcast %cst_11 : f32 to vector<8x128xf32>
    %40 = arith.addf %39, %38 : vector<8x128xf32>
    %41 = arith.divf %39, %40 : vector<8x128xf32>
    %42 = math.tanh %36 : vector<8x128xf32>
    %43 = vector.extract_strided_slice %41 {offsets = [0, 0], sizes = [8, 32], strides = [1, 1]} : vector<8x128xf32> to vector<8x32xf32>
    %44 = vector.extract_strided_slice %41 {offsets = [0, 32], sizes = [8, 32], strides = [1, 1]} : vector<8x128xf32> to vector<8x32xf32>
    %45 = vector.extract_strided_slice %42 {offsets = [0, 64], sizes = [8, 32], strides = [1, 1]} : vector<8x128xf32> to vector<8x32xf32>
    %46 = vector.extract_strided_slice %41 {offsets = [0, 96], sizes = [8, 32], strides = [1, 1]} : vector<8x128xf32> to vector<8x32xf32>
    %47 = arith.mulf %44, %27 : vector<8x32xf32>
    %48 = arith.mulf %43, %45 : vector<8x32xf32>
    %49 = arith.addf %47, %48 : vector<8x32xf32>
    %50 = math.tanh %49 : vector<8x32xf32>
    %51 = arith.mulf %46, %50 : vector<8x32xf32>
    %52 = vector.extract_strided_slice %33 {offsets = [0, 128], sizes = [8, 128], strides = [1, 1]} : vector<8x256xf32> to vector<8x128xf32>
    %53 = arith.negf %52 : vector<8x128xf32>
    %54 = math.exp %53 : vector<8x128xf32>
    %cst_12 = arith.constant 1.000000e+00 : f32
    %55 = vector.broadcast %cst_12 : f32 to vector<8x128xf32>
    %56 = arith.addf %55, %54 : vector<8x128xf32>
    %57 = arith.divf %55, %56 : vector<8x128xf32>
    %58 = math.tanh %52 : vector<8x128xf32>
    %59 = vector.extract_strided_slice %57 {offsets = [0, 0], sizes = [8, 32], strides = [1, 1]} : vector<8x128xf32> to vector<8x32xf32>
    %60 = vector.extract_strided_slice %57 {offsets = [0, 32], sizes = [8, 32], strides = [1, 1]} : vector<8x128xf32> to vector<8x32xf32>
    %61 = vector.extract_strided_slice %58 {offsets = [0, 64], sizes = [8, 32], strides = [1, 1]} : vector<8x128xf32> to vector<8x32xf32>
    %62 = vector.extract_strided_slice %57 {offsets = [0, 96], sizes = [8, 32], strides = [1, 1]} : vector<8x128xf32> to vector<8x32xf32>
    %63 = arith.mulf %60, %8 : vector<8x32xf32>
    %64 = arith.mulf %59, %61 : vector<8x32xf32>
    %65 = arith.addf %63, %64 : vector<8x32xf32>
    %66 = math.tanh %65 : vector<8x32xf32>
    %67 = arith.mulf %62, %66 : vector<8x32xf32>
    %68 = tpu.concatenate %51, %67 in 1 : vector<8x32xf32>, vector<8x32xf32> -> vector<8x64xf32>
    %cst_13 = arith.constant dense<0.000000e+00> : vector<8x256xf32>
    %69 = tpu.matmul %68, %2, %cst_13 {dimension_numbers = #tpu.dot_dimension_numbers<[1], [0], [0], [1], [0, 0, 1, 1], [], []>} : vector<8x64xf32>, vector<64x256xf32>, vector<8x256xf32> -> vector<8x256xf32>
    %70 = vector.broadcast %3 : vector<1x256xf32> to vector<8x256xf32>
    %71 = arith.addf %69, %70 : vector<8x256xf32>
    %72 = vector.extract_strided_slice %71 {offsets = [0, 0], sizes = [8, 128], strides = [1, 1]} : vector<8x256xf32> to vector<8x128xf32>
    %73 = vector.extract_strided_slice %5 {offsets = [16, 0], sizes = [8, 128], strides = [1, 1]} : vector<64x128xf32> to vector<8x128xf32>
    %74 = arith.addf %72, %73 : vector<8x128xf32>
    %75 = arith.negf %74 : vector<8x128xf32>
    %76 = math.exp %75 : vector<8x128xf32>
    %cst_14 = arith.constant 1.000000e+00 : f32
    %77 = vector.broadcast %cst_14 : f32 to vector<8x128xf32>
    %78 = arith.addf %77, %76 : vector<8x128xf32>
    %79 = arith.divf %77, %78 : vector<8x128xf32>
    %80 = math.tanh %74 : vector<8x128xf32>
    %81 = vector.extract_strided_slice %79 {offsets = [0, 0], sizes = [8, 32], strides = [1, 1]} : vector<8x128xf32> to vector<8x32xf32>
    %82 = vector.extract_strided_slice %79 {offsets = [0, 32], sizes = [8, 32], strides = [1, 1]} : vector<8x128xf32> to vector<8x32xf32>
    %83 = vector.extract_strided_slice %80 {offsets = [0, 64], sizes = [8, 32], strides = [1, 1]} : vector<8x128xf32> to vector<8x32xf32>
    %84 = vector.extract_strided_slice %79 {offsets = [0, 96], sizes = [8, 32], strides = [1, 1]} : vector<8x128xf32> to vector<8x32xf32>
    %85 = arith.mulf %82, %49 : vector<8x32xf32>
    %86 = arith.mulf %81, %83 : vector<8x32xf32>
    %87 = arith.addf %85, %86 : vector<8x32xf32>
    %88 = math.tanh %87 : vector<8x32xf32>
    %89 = arith.mulf %84, %88 : vector<8x32xf32>
    %90 = vector.extract_strided_slice %71 {offsets = [0, 128], sizes = [8, 128], strides = [1, 1]} : vector<8x256xf32> to vector<8x128xf32>
    %91 = arith.negf %90 : vector<8x128xf32>
    %92 = math.exp %91 : vector<8x128xf32>
    %cst_15 = arith.constant 1.000000e+00 : f32
    %93 = vector.broadcast %cst_15 : f32 to vector<8x128xf32>
    %94 = arith.addf %93, %92 : vector<8x128xf32>
    %95 = arith.divf %93, %94 : vector<8x128xf32>
    %96 = math.tanh %90 : vector<8x128xf32>
    %97 = vector.extract_strided_slice %95 {offsets = [0, 0], sizes = [8, 32], strides = [1, 1]} : vector<8x128xf32> to vector<8x32xf32>
    %98 = vector.extract_strided_slice %95 {offsets = [0, 32], sizes = [8, 32], strides = [1, 1]} : vector<8x128xf32> to vector<8x32xf32>
    %99 = vector.extract_strided_slice %96 {offsets = [0, 64], sizes = [8, 32], strides = [1, 1]} : vector<8x128xf32> to vector<8x32xf32>
    %100 = vector.extract_strided_slice %95 {offsets = [0, 96], sizes = [8, 32], strides = [1, 1]} : vector<8x128xf32> to vector<8x32xf32>
    %101 = arith.mulf %98, %65 : vector<8x32xf32>
    %102 = arith.mulf %97, %99 : vector<8x32xf32>
    %103 = arith.addf %101, %102 : vector<8x32xf32>
    %104 = math.tanh %103 : vector<8x32xf32>
    %105 = arith.mulf %100, %104 : vector<8x32xf32>
    %106 = tpu.concatenate %89, %105 in 1 : vector<8x32xf32>, vector<8x32xf32> -> vector<8x64xf32>
    %cst_16 = arith.constant dense<0.000000e+00> : vector<8x256xf32>
    %107 = tpu.matmul %106, %2, %cst_16 {dimension_numbers = #tpu.dot_dimension_numbers<[1], [0], [0], [1], [0, 0, 1, 1], [], []>} : vector<8x64xf32>, vector<64x256xf32>, vector<8x256xf32> -> vector<8x256xf32>
    %108 = vector.broadcast %3 : vector<1x256xf32> to vector<8x256xf32>
    %109 = arith.addf %107, %108 : vector<8x256xf32>
    %110 = vector.extract_strided_slice %109 {offsets = [0, 0], sizes = [8, 128], strides = [1, 1]} : vector<8x256xf32> to vector<8x128xf32>
    %111 = vector.extract_strided_slice %5 {offsets = [24, 0], sizes = [8, 128], strides = [1, 1]} : vector<64x128xf32> to vector<8x128xf32>
    %112 = arith.addf %110, %111 : vector<8x128xf32>
    %113 = arith.negf %112 : vector<8x128xf32>
    %114 = math.exp %113 : vector<8x128xf32>
    %cst_17 = arith.constant 1.000000e+00 : f32
    %115 = vector.broadcast %cst_17 : f32 to vector<8x128xf32>
    %116 = arith.addf %115, %114 : vector<8x128xf32>
    %117 = arith.divf %115, %116 : vector<8x128xf32>
    %118 = math.tanh %112 : vector<8x128xf32>
    %119 = vector.extract_strided_slice %117 {offsets = [0, 0], sizes = [8, 32], strides = [1, 1]} : vector<8x128xf32> to vector<8x32xf32>
    %120 = vector.extract_strided_slice %117 {offsets = [0, 32], sizes = [8, 32], strides = [1, 1]} : vector<8x128xf32> to vector<8x32xf32>
    %121 = vector.extract_strided_slice %118 {offsets = [0, 64], sizes = [8, 32], strides = [1, 1]} : vector<8x128xf32> to vector<8x32xf32>
    %122 = vector.extract_strided_slice %117 {offsets = [0, 96], sizes = [8, 32], strides = [1, 1]} : vector<8x128xf32> to vector<8x32xf32>
    %123 = arith.mulf %120, %87 : vector<8x32xf32>
    %124 = arith.mulf %119, %121 : vector<8x32xf32>
    %125 = arith.addf %123, %124 : vector<8x32xf32>
    %126 = math.tanh %125 : vector<8x32xf32>
    %127 = arith.mulf %122, %126 : vector<8x32xf32>
    %128 = vector.extract_strided_slice %109 {offsets = [0, 128], sizes = [8, 128], strides = [1, 1]} : vector<8x256xf32> to vector<8x128xf32>
    %129 = arith.negf %128 : vector<8x128xf32>
    %130 = math.exp %129 : vector<8x128xf32>
    %cst_18 = arith.constant 1.000000e+00 : f32
    %131 = vector.broadcast %cst_18 : f32 to vector<8x128xf32>
    %132 = arith.addf %131, %130 : vector<8x128xf32>
    %133 = arith.divf %131, %132 : vector<8x128xf32>
    %134 = math.tanh %128 : vector<8x128xf32>
    %135 = vector.extract_strided_slice %133 {offsets = [0, 0], sizes = [8, 32], strides = [1, 1]} : vector<8x128xf32> to vector<8x32xf32>
    %136 = vector.extract_strided_slice %133 {offsets = [0, 32], sizes = [8, 32], strides = [1, 1]} : vector<8x128xf32> to vector<8x32xf32>
    %137 = vector.extract_strided_slice %134 {offsets = [0, 64], sizes = [8, 32], strides = [1, 1]} : vector<8x128xf32> to vector<8x32xf32>
    %138 = vector.extract_strided_slice %133 {offsets = [0, 96], sizes = [8, 32], strides = [1, 1]} : vector<8x128xf32> to vector<8x32xf32>
    %139 = arith.mulf %136, %103 : vector<8x32xf32>
    %140 = arith.mulf %135, %137 : vector<8x32xf32>
    %141 = arith.addf %139, %140 : vector<8x32xf32>
    %142 = math.tanh %141 : vector<8x32xf32>
    %143 = arith.mulf %138, %142 : vector<8x32xf32>
    %144 = tpu.concatenate %127, %143 in 1 : vector<8x32xf32>, vector<8x32xf32> -> vector<8x64xf32>
    %cst_19 = arith.constant dense<0.000000e+00> : vector<8x256xf32>
    %145 = tpu.matmul %144, %2, %cst_19 {dimension_numbers = #tpu.dot_dimension_numbers<[1], [0], [0], [1], [0, 0, 1, 1], [], []>} : vector<8x64xf32>, vector<64x256xf32>, vector<8x256xf32> -> vector<8x256xf32>
    %146 = vector.broadcast %3 : vector<1x256xf32> to vector<8x256xf32>
    %147 = arith.addf %145, %146 : vector<8x256xf32>
    %148 = vector.extract_strided_slice %147 {offsets = [0, 0], sizes = [8, 128], strides = [1, 1]} : vector<8x256xf32> to vector<8x128xf32>
    %149 = vector.extract_strided_slice %5 {offsets = [32, 0], sizes = [8, 128], strides = [1, 1]} : vector<64x128xf32> to vector<8x128xf32>
    %150 = arith.addf %148, %149 : vector<8x128xf32>
    %151 = arith.negf %150 : vector<8x128xf32>
    %152 = math.exp %151 : vector<8x128xf32>
    %cst_20 = arith.constant 1.000000e+00 : f32
    %153 = vector.broadcast %cst_20 : f32 to vector<8x128xf32>
    %154 = arith.addf %153, %152 : vector<8x128xf32>
    %155 = arith.divf %153, %154 : vector<8x128xf32>
    %156 = math.tanh %150 : vector<8x128xf32>
    %157 = vector.extract_strided_slice %155 {offsets = [0, 0], sizes = [8, 32], strides = [1, 1]} : vector<8x128xf32> to vector<8x32xf32>
    %158 = vector.extract_strided_slice %155 {offsets = [0, 32], sizes = [8, 32], strides = [1, 1]} : vector<8x128xf32> to vector<8x32xf32>
    %159 = vector.extract_strided_slice %156 {offsets = [0, 64], sizes = [8, 32], strides = [1, 1]} : vector<8x128xf32> to vector<8x32xf32>
    %160 = vector.extract_strided_slice %155 {offsets = [0, 96], sizes = [8, 32], strides = [1, 1]} : vector<8x128xf32> to vector<8x32xf32>
    %161 = arith.mulf %158, %125 : vector<8x32xf32>
    %162 = arith.mulf %157, %159 : vector<8x32xf32>
    %163 = arith.addf %161, %162 : vector<8x32xf32>
    %164 = math.tanh %163 : vector<8x32xf32>
    %165 = arith.mulf %160, %164 : vector<8x32xf32>
    %166 = vector.extract_strided_slice %147 {offsets = [0, 128], sizes = [8, 128], strides = [1, 1]} : vector<8x256xf32> to vector<8x128xf32>
    %167 = arith.negf %166 : vector<8x128xf32>
    %168 = math.exp %167 : vector<8x128xf32>
    %cst_21 = arith.constant 1.000000e+00 : f32
    %169 = vector.broadcast %cst_21 : f32 to vector<8x128xf32>
    %170 = arith.addf %169, %168 : vector<8x128xf32>
    %171 = arith.divf %169, %170 : vector<8x128xf32>
    %172 = math.tanh %166 : vector<8x128xf32>
    %173 = vector.extract_strided_slice %171 {offsets = [0, 0], sizes = [8, 32], strides = [1, 1]} : vector<8x128xf32> to vector<8x32xf32>
    %174 = vector.extract_strided_slice %171 {offsets = [0, 32], sizes = [8, 32], strides = [1, 1]} : vector<8x128xf32> to vector<8x32xf32>
    %175 = vector.extract_strided_slice %172 {offsets = [0, 64], sizes = [8, 32], strides = [1, 1]} : vector<8x128xf32> to vector<8x32xf32>
    %176 = vector.extract_strided_slice %171 {offsets = [0, 96], sizes = [8, 32], strides = [1, 1]} : vector<8x128xf32> to vector<8x32xf32>
    %177 = arith.mulf %174, %141 : vector<8x32xf32>
    %178 = arith.mulf %173, %175 : vector<8x32xf32>
    %179 = arith.addf %177, %178 : vector<8x32xf32>
    %180 = math.tanh %179 : vector<8x32xf32>
    %181 = arith.mulf %176, %180 : vector<8x32xf32>
    %182 = tpu.concatenate %165, %181 in 1 : vector<8x32xf32>, vector<8x32xf32> -> vector<8x64xf32>
    %cst_22 = arith.constant dense<0.000000e+00> : vector<8x256xf32>
    %183 = tpu.matmul %182, %2, %cst_22 {dimension_numbers = #tpu.dot_dimension_numbers<[1], [0], [0], [1], [0, 0, 1, 1], [], []>} : vector<8x64xf32>, vector<64x256xf32>, vector<8x256xf32> -> vector<8x256xf32>
    %184 = vector.broadcast %3 : vector<1x256xf32> to vector<8x256xf32>
    %185 = arith.addf %183, %184 : vector<8x256xf32>
    %186 = vector.extract_strided_slice %185 {offsets = [0, 0], sizes = [8, 128], strides = [1, 1]} : vector<8x256xf32> to vector<8x128xf32>
    %187 = vector.extract_strided_slice %5 {offsets = [40, 0], sizes = [8, 128], strides = [1, 1]} : vector<64x128xf32> to vector<8x128xf32>
    %188 = arith.addf %186, %187 : vector<8x128xf32>
    %189 = arith.negf %188 : vector<8x128xf32>
    %190 = math.exp %189 : vector<8x128xf32>
    %cst_23 = arith.constant 1.000000e+00 : f32
    %191 = vector.broadcast %cst_23 : f32 to vector<8x128xf32>
    %192 = arith.addf %191, %190 : vector<8x128xf32>
    %193 = arith.divf %191, %192 : vector<8x128xf32>
    %194 = math.tanh %188 : vector<8x128xf32>
    %195 = vector.extract_strided_slice %193 {offsets = [0, 0], sizes = [8, 32], strides = [1, 1]} : vector<8x128xf32> to vector<8x32xf32>
    %196 = vector.extract_strided_slice %193 {offsets = [0, 32], sizes = [8, 32], strides = [1, 1]} : vector<8x128xf32> to vector<8x32xf32>
    %197 = vector.extract_strided_slice %194 {offsets = [0, 64], sizes = [8, 32], strides = [1, 1]} : vector<8x128xf32> to vector<8x32xf32>
    %198 = vector.extract_strided_slice %193 {offsets = [0, 96], sizes = [8, 32], strides = [1, 1]} : vector<8x128xf32> to vector<8x32xf32>
    %199 = arith.mulf %196, %163 : vector<8x32xf32>
    %200 = arith.mulf %195, %197 : vector<8x32xf32>
    %201 = arith.addf %199, %200 : vector<8x32xf32>
    %202 = math.tanh %201 : vector<8x32xf32>
    %203 = arith.mulf %198, %202 : vector<8x32xf32>
    %204 = vector.extract_strided_slice %185 {offsets = [0, 128], sizes = [8, 128], strides = [1, 1]} : vector<8x256xf32> to vector<8x128xf32>
    %205 = arith.negf %204 : vector<8x128xf32>
    %206 = math.exp %205 : vector<8x128xf32>
    %cst_24 = arith.constant 1.000000e+00 : f32
    %207 = vector.broadcast %cst_24 : f32 to vector<8x128xf32>
    %208 = arith.addf %207, %206 : vector<8x128xf32>
    %209 = arith.divf %207, %208 : vector<8x128xf32>
    %210 = math.tanh %204 : vector<8x128xf32>
    %211 = vector.extract_strided_slice %209 {offsets = [0, 0], sizes = [8, 32], strides = [1, 1]} : vector<8x128xf32> to vector<8x32xf32>
    %212 = vector.extract_strided_slice %209 {offsets = [0, 32], sizes = [8, 32], strides = [1, 1]} : vector<8x128xf32> to vector<8x32xf32>
    %213 = vector.extract_strided_slice %210 {offsets = [0, 64], sizes = [8, 32], strides = [1, 1]} : vector<8x128xf32> to vector<8x32xf32>
    %214 = vector.extract_strided_slice %209 {offsets = [0, 96], sizes = [8, 32], strides = [1, 1]} : vector<8x128xf32> to vector<8x32xf32>
    %215 = arith.mulf %212, %179 : vector<8x32xf32>
    %216 = arith.mulf %211, %213 : vector<8x32xf32>
    %217 = arith.addf %215, %216 : vector<8x32xf32>
    %218 = math.tanh %217 : vector<8x32xf32>
    %219 = arith.mulf %214, %218 : vector<8x32xf32>
    %220 = tpu.concatenate %203, %219 in 1 : vector<8x32xf32>, vector<8x32xf32> -> vector<8x64xf32>
    %cst_25 = arith.constant dense<0.000000e+00> : vector<8x256xf32>
    %221 = tpu.matmul %220, %2, %cst_25 {dimension_numbers = #tpu.dot_dimension_numbers<[1], [0], [0], [1], [0, 0, 1, 1], [], []>} : vector<8x64xf32>, vector<64x256xf32>, vector<8x256xf32> -> vector<8x256xf32>
    %222 = vector.broadcast %3 : vector<1x256xf32> to vector<8x256xf32>
    %223 = arith.addf %221, %222 : vector<8x256xf32>
    %224 = vector.extract_strided_slice %223 {offsets = [0, 0], sizes = [8, 128], strides = [1, 1]} : vector<8x256xf32> to vector<8x128xf32>
    %225 = vector.extract_strided_slice %5 {offsets = [48, 0], sizes = [8, 128], strides = [1, 1]} : vector<64x128xf32> to vector<8x128xf32>
    %226 = arith.addf %224, %225 : vector<8x128xf32>
    %227 = arith.negf %226 : vector<8x128xf32>
    %228 = math.exp %227 : vector<8x128xf32>
    %cst_26 = arith.constant 1.000000e+00 : f32
    %229 = vector.broadcast %cst_26 : f32 to vector<8x128xf32>
    %230 = arith.addf %229, %228 : vector<8x128xf32>
    %231 = arith.divf %229, %230 : vector<8x128xf32>
    %232 = math.tanh %226 : vector<8x128xf32>
    %233 = vector.extract_strided_slice %231 {offsets = [0, 0], sizes = [8, 32], strides = [1, 1]} : vector<8x128xf32> to vector<8x32xf32>
    %234 = vector.extract_strided_slice %231 {offsets = [0, 32], sizes = [8, 32], strides = [1, 1]} : vector<8x128xf32> to vector<8x32xf32>
    %235 = vector.extract_strided_slice %232 {offsets = [0, 64], sizes = [8, 32], strides = [1, 1]} : vector<8x128xf32> to vector<8x32xf32>
    %236 = vector.extract_strided_slice %231 {offsets = [0, 96], sizes = [8, 32], strides = [1, 1]} : vector<8x128xf32> to vector<8x32xf32>
    %237 = arith.mulf %234, %201 : vector<8x32xf32>
    %238 = arith.mulf %233, %235 : vector<8x32xf32>
    %239 = arith.addf %237, %238 : vector<8x32xf32>
    %240 = math.tanh %239 : vector<8x32xf32>
    %241 = arith.mulf %236, %240 : vector<8x32xf32>
    %242 = vector.extract_strided_slice %223 {offsets = [0, 128], sizes = [8, 128], strides = [1, 1]} : vector<8x256xf32> to vector<8x128xf32>
    %243 = arith.negf %242 : vector<8x128xf32>
    %244 = math.exp %243 : vector<8x128xf32>
    %cst_27 = arith.constant 1.000000e+00 : f32
    %245 = vector.broadcast %cst_27 : f32 to vector<8x128xf32>
    %246 = arith.addf %245, %244 : vector<8x128xf32>
    %247 = arith.divf %245, %246 : vector<8x128xf32>
    %248 = math.tanh %242 : vector<8x128xf32>
    %249 = vector.extract_strided_slice %247 {offsets = [0, 0], sizes = [8, 32], strides = [1, 1]} : vector<8x128xf32> to vector<8x32xf32>
    %250 = vector.extract_strided_slice %247 {offsets = [0, 32], sizes = [8, 32], strides = [1, 1]} : vector<8x128xf32> to vector<8x32xf32>
    %251 = vector.extract_strided_slice %248 {offsets = [0, 64], sizes = [8, 32], strides = [1, 1]} : vector<8x128xf32> to vector<8x32xf32>
    %252 = vector.extract_strided_slice %247 {offsets = [0, 96], sizes = [8, 32], strides = [1, 1]} : vector<8x128xf32> to vector<8x32xf32>
    %253 = arith.mulf %250, %217 : vector<8x32xf32>
    %254 = arith.mulf %249, %251 : vector<8x32xf32>
    %255 = arith.addf %253, %254 : vector<8x32xf32>
    %256 = math.tanh %255 : vector<8x32xf32>
    %257 = arith.mulf %252, %256 : vector<8x32xf32>
    %258 = tpu.concatenate %241, %257 in 1 : vector<8x32xf32>, vector<8x32xf32> -> vector<8x64xf32>
    %cst_28 = arith.constant dense<0.000000e+00> : vector<8x256xf32>
    %259 = tpu.matmul %258, %2, %cst_28 {dimension_numbers = #tpu.dot_dimension_numbers<[1], [0], [0], [1], [0, 0, 1, 1], [], []>} : vector<8x64xf32>, vector<64x256xf32>, vector<8x256xf32> -> vector<8x256xf32>
    %260 = vector.broadcast %3 : vector<1x256xf32> to vector<8x256xf32>
    %261 = arith.addf %259, %260 : vector<8x256xf32>
    %262 = vector.extract_strided_slice %261 {offsets = [0, 0], sizes = [8, 128], strides = [1, 1]} : vector<8x256xf32> to vector<8x128xf32>
    %263 = vector.extract_strided_slice %5 {offsets = [56, 0], sizes = [8, 128], strides = [1, 1]} : vector<64x128xf32> to vector<8x128xf32>
    %264 = arith.addf %262, %263 : vector<8x128xf32>
    %265 = arith.negf %264 : vector<8x128xf32>
    %266 = math.exp %265 : vector<8x128xf32>
    %cst_29 = arith.constant 1.000000e+00 : f32
    %267 = vector.broadcast %cst_29 : f32 to vector<8x128xf32>
    %268 = arith.addf %267, %266 : vector<8x128xf32>
    %269 = arith.divf %267, %268 : vector<8x128xf32>
    %270 = math.tanh %264 : vector<8x128xf32>
    %271 = vector.extract_strided_slice %269 {offsets = [0, 0], sizes = [8, 32], strides = [1, 1]} : vector<8x128xf32> to vector<8x32xf32>
    %272 = vector.extract_strided_slice %269 {offsets = [0, 32], sizes = [8, 32], strides = [1, 1]} : vector<8x128xf32> to vector<8x32xf32>
    %273 = vector.extract_strided_slice %270 {offsets = [0, 64], sizes = [8, 32], strides = [1, 1]} : vector<8x128xf32> to vector<8x32xf32>
    %274 = vector.extract_strided_slice %269 {offsets = [0, 96], sizes = [8, 32], strides = [1, 1]} : vector<8x128xf32> to vector<8x32xf32>
    %275 = arith.mulf %272, %239 : vector<8x32xf32>
    %276 = arith.mulf %271, %273 : vector<8x32xf32>
    %277 = arith.addf %275, %276 : vector<8x32xf32>
    %278 = math.tanh %277 : vector<8x32xf32>
    %279 = arith.mulf %274, %278 : vector<8x32xf32>
    %280 = vector.extract_strided_slice %261 {offsets = [0, 128], sizes = [8, 128], strides = [1, 1]} : vector<8x256xf32> to vector<8x128xf32>
    %281 = arith.negf %280 : vector<8x128xf32>
    %282 = math.exp %281 : vector<8x128xf32>
    %cst_30 = arith.constant 1.000000e+00 : f32
    %283 = vector.broadcast %cst_30 : f32 to vector<8x128xf32>
    %284 = arith.addf %283, %282 : vector<8x128xf32>
    %285 = arith.divf %283, %284 : vector<8x128xf32>
    %286 = math.tanh %280 : vector<8x128xf32>
    %287 = vector.extract_strided_slice %285 {offsets = [0, 0], sizes = [8, 32], strides = [1, 1]} : vector<8x128xf32> to vector<8x32xf32>
    %288 = vector.extract_strided_slice %285 {offsets = [0, 32], sizes = [8, 32], strides = [1, 1]} : vector<8x128xf32> to vector<8x32xf32>
    %289 = vector.extract_strided_slice %286 {offsets = [0, 64], sizes = [8, 32], strides = [1, 1]} : vector<8x128xf32> to vector<8x32xf32>
    %290 = vector.extract_strided_slice %285 {offsets = [0, 96], sizes = [8, 32], strides = [1, 1]} : vector<8x128xf32> to vector<8x32xf32>
    %291 = arith.mulf %288, %255 : vector<8x32xf32>
    %292 = arith.mulf %287, %289 : vector<8x32xf32>
    %293 = arith.addf %291, %292 : vector<8x32xf32>
    %294 = math.tanh %293 : vector<8x32xf32>
    %295 = arith.mulf %290, %294 : vector<8x32xf32>
    %296 = tpu.concatenate %279, %295 in 1 : vector<8x32xf32>, vector<8x32xf32> -> vector<8x64xf32>
    %cst_31 = arith.constant dense<0.000000e+00> : vector<8x256xf32>
    %297 = tpu.matmul %296, %2, %cst_31 {dimension_numbers = #tpu.dot_dimension_numbers<[1], [0], [0], [1], [0, 0, 1, 1], [], []>} : vector<8x64xf32>, vector<64x256xf32>, vector<8x256xf32> -> vector<8x256xf32>
    %298 = vector.broadcast %3 : vector<1x256xf32> to vector<8x256xf32>
    %299 = arith.addf %297, %298 : vector<8x256xf32>
    %300 = vector.extract_strided_slice %299 {offsets = [0, 128], sizes = [8, 128], strides = [1, 1]} : vector<8x256xf32> to vector<8x128xf32>
    %301 = arith.negf %300 : vector<8x128xf32>
    %302 = math.exp %301 : vector<8x128xf32>
    %cst_32 = arith.constant 1.000000e+00 : f32
    %303 = vector.broadcast %cst_32 : f32 to vector<8x128xf32>
    %304 = arith.addf %303, %302 : vector<8x128xf32>
    %305 = arith.divf %303, %304 : vector<8x128xf32>
    %306 = math.tanh %300 : vector<8x128xf32>
    %307 = vector.extract_strided_slice %305 {offsets = [0, 0], sizes = [8, 32], strides = [1, 1]} : vector<8x128xf32> to vector<8x32xf32>
    %308 = vector.extract_strided_slice %305 {offsets = [0, 32], sizes = [8, 32], strides = [1, 1]} : vector<8x128xf32> to vector<8x32xf32>
    %309 = vector.extract_strided_slice %306 {offsets = [0, 64], sizes = [8, 32], strides = [1, 1]} : vector<8x128xf32> to vector<8x32xf32>
    %310 = vector.extract_strided_slice %305 {offsets = [0, 96], sizes = [8, 32], strides = [1, 1]} : vector<8x128xf32> to vector<8x32xf32>
    %311 = arith.mulf %308, %293 : vector<8x32xf32>
    %312 = arith.mulf %307, %309 : vector<8x32xf32>
    %313 = arith.addf %311, %312 : vector<8x32xf32>
    %314 = math.tanh %313 : vector<8x32xf32>
    %315 = arith.mulf %310, %314 : vector<8x32xf32>
    %316 = tpu.concatenate %67, %105, %143, %181, %219, %257, %295, %315 in 0 : vector<8x32xf32>, vector<8x32xf32>, vector<8x32xf32>, vector<8x32xf32>, vector<8x32xf32>, vector<8x32xf32>, vector<8x32xf32>, vector<8x32xf32> -> vector<64x32xf32>
    %c88 = arith.constant 88 : index
    %c0_33 = arith.constant 0 : index
    %317 = vector.load %arg2[%c88, %c0_33] : memref<128x256xf32, #tpu.memory_space<vmem>>, vector<32x256xf32>
    %318 = vector.extract_strided_slice %317 {offsets = [0, 0], sizes = [32, 128], strides = [1, 1]} : vector<32x256xf32> to vector<32x128xf32>
    %c120 = arith.constant 120 : index
    %c0_34 = arith.constant 0 : index
    %319 = vector.load %arg2[%c120, %c0_34] : memref<128x256xf32, #tpu.memory_space<vmem>>, vector<1x256xf32>
    %320 = vector.extract_strided_slice %319 {offsets = [0, 0], sizes = [1, 128], strides = [1, 1]} : vector<1x256xf32> to vector<1x128xf32>
    %cst_35 = arith.constant dense<0.000000e+00> : vector<64x128xf32>
    %321 = tpu.matmul %316, %318, %cst_35 {dimension_numbers = #tpu.dot_dimension_numbers<[1], [0], [0], [1], [0, 0, 1, 1], [], []>} : vector<64x32xf32>, vector<32x128xf32>, vector<64x128xf32> -> vector<64x128xf32>
    %322 = vector.broadcast %320 : vector<1x128xf32> to vector<64x128xf32>
    %323 = arith.addf %321, %322 : vector<64x128xf32>
    %c0_36 = arith.constant 0 : index
    %c0_37 = arith.constant 0 : index
    %324 = vector.load %arg3[%c0_36, %c0_37] : memref<64x128xf32, #tpu.memory_space<vmem>>, vector<64x128xf32>
    tpu.vector_store %arg3[%c0_36, %c0_37], %323 {strides = array<i32>} : memref<64x128xf32, #tpu.memory_space<vmem>>, vector<64x128xf32>,
    return
  }
  func.func @transform_0(%arg0: i32) -> (i32, i32) {
    %c0_i32 = arith.constant 0 : i32
    %c0_i32_0 = arith.constant 0 : i32
    %c0_i32_1 = arith.constant 0 : i32
    return %c0_i32, %c0_i32_0 : i32, i32
  }
  func.func @transform_1(%arg0: i32) -> (i32, i32) {
    %c0_i32 = arith.constant 0 : i32
    %c0_i32_0 = arith.constant 0 : i32
    %c0_i32_1 = arith.constant 0 : i32
    return %c0_i32, %c0_i32_0 : i32, i32
  }
  func.func @transform_2(%arg0: i32) -> (i32, i32) {
    %c0_i32 = arith.constant 0 : i32
    %c0_i32_0 = arith.constant 0 : i32
    %c0_i32_1 = arith.constant 0 : i32
    return %c0_i32, %c0_i32_0 : i32, i32
  }
}

</mosaic_0001>

<llo_original>
// kernel: lstm_forward.1
$region0: #{lstm_forward.1}
  #allocation0 [shape = 'u32[]', space=smem, size = 0x4, offset = 0x4, fixed_abs, tag = 'smem constant byte address 0x4 - core index']
  #allocation1 [shape = 'u32[144,128]{1,0:T(1,128)}', space=vmem, size = 0x12000, scoped, tag = 'internal scratch']
  %s0 = inlined_call_operand.hbm [shape: f32[64,16], index: 0, kind: input, shape index: {}]
  %s1 = inlined_call_operand.hbm [shape: f32[128,256], index: 1, kind: input, shape index: {}]
  %s2 = inlined_call_operand.vmem [shape: f32[64,128], index: 2, kind: output, shape index: {}]
  %s3 = sld [smem:[#allocation0]]
  $region26: #{lstm_forward.1} parent=0
    _
  %s5 = ssub.s32 1, %s3
  %s6 = scalar_select 0, %s5, %s3
  $region1: #{lstm_forward.1} parent=0
    #allocation2 [shape = 'u8[32768]{0}', space=vmem, size = 0x8000, scoped, tag = 'input window, operand 0, single buffered']
    #allocation3 [shape = 's32[1]{0}', space=sflag, size = 0x4, scoped, tag = 'scoped memory for lstm_forward.1']
    #allocation4 [shape = 'u8[131072]{0}', space=vmem, size = 0x20000, scoped, tag = 'input window, operand 1, single buffered']
    #allocation5 [shape = 's32[1]{0}', space=sflag, size = 0x4, scoped, tag = 'scoped memory for lstm_forward.1']
    %7 = vsyncpa [#allocation3], 0
    %8 = vsyncpa [#allocation5], 0
    // Predicated region
    $region2: #{lstm_forward.1} parent=1 // pred_check
      _
    $region3: #{lstm_forward.1} parent=1 // pred_check_branch
      %10 = sbr.rel (0) target = $region5
    $region4: #{lstm_forward.1} parent=1 // pred_region
      %s12 = ssub.s32 1024, 1024
      %13 = vsyncadd [#allocation3], %s12
      %s14 = sshll.u32 [#allocation2], 4
      %s15 = int_to_ptr.vmem [resolvable:$true] %s14
      %20 = dma.hbm_to_vmem [thread:$0]  %s0, 1024, %s15, [#allocation3], 128, 128, 8
    $region5: #{lstm_forward.1} parent=1 // pred_fallthru
      _
    // Predicated region
    $region6: #{lstm_forward.1} parent=1 // pred_check
      _
    $region7: #{lstm_forward.1} parent=1 // pred_check_branch
      %22 = sbr.rel (0) target = $region9
    $region8: #{lstm_forward.1} parent=1 // pred_region
      %s24 = ssub.s32 4096, 4096
      %25 = vsyncadd [#allocation5], %s24
      %s26 = sshll.u32 [#allocation4], 4
      %s27 = int_to_ptr.vmem [resolvable:$true] %s26
      %32 = dma.hbm_to_vmem [thread:$0]  %s1, 4096, %s27, [#allocation5], 256, 256, 16
    $region9: #{lstm_forward.1} parent=1 // pred_fallthru
      _
    // Predicated region
    $region10: #{lstm_forward.1} parent=1 // pred_check
      _
    $region11: #{lstm_forward.1} parent=1 // pred_check_branch
      %34 = sbr.rel (0) target = $region13
    $region12: #{lstm_forward.1} parent=1 // pred_region
      %35 = dma.done [#allocation3], 1024
    $region13: #{lstm_forward.1} parent=1 // pred_fallthru
      _
    // Predicated region
    $region14: #{lstm_forward.1} parent=1 // pred_check
      _
    $region15: #{lstm_forward.1} parent=1 // pred_check_branch
      %37 = sbr.rel (0) target = $region17
    $region16: #{lstm_forward.1} parent=1 // pred_region
      %38 = dma.done [#allocation5], 4096
    $region17: #{lstm_forward.1} parent=1 // pred_fallthru
      _
    %v39 = vld [vmem:[#allocation4] sm:$0xff]
    %v40 = vld [vmem:[#allocation4 + $0x10] sm:$0xff]
    %v41 = vld [vmem:[#allocation4 + $0x20] sm:$0xff]
    %v42 = vld [vmem:[#allocation4 + $0x28] sm:$0xff]
    %v43 = vld [vmem:[#allocation4 + $0x30] sm:$0xff]
    %v44 = vld [vmem:[#allocation4 + $0x38] sm:$0xff]
    %v45 = vld [vmem:[#allocation4 + $0x40] sm:$0xff]
    %v46 = vld [vmem:[#allocation4 + $0x48] sm:$0xff]
    %v47 = vld [vmem:[#allocation4 + $0x50] sm:$0xff]
    %v48 = vld [vmem:[#allocation4 + $0x58] sm:$0xff]
    %v49 = vld [vmem:[#allocation4 + $0x60] sm:$0xff]
    %v50 = vld [vmem:[#allocation4 + $0x68] sm:$0xff]
    %v51 = vld [vmem:[#allocation4 + $0x70] sm:$0xff]
    %v52 = vld [vmem:[#allocation4 + $0x78] sm:$0xff]
    %v53 = vld [vmem:[#allocation4 + $0x80] sm:$0xff]
    %v54 = vld [vmem:[#allocation4 + $0x88] sm:$0xff]
    %v55 = vld [vmem:[#allocation4 + $0x90] sm:$0xff]
    %v56 = vld [vmem:[#allocation4 + $0x98] sm:$0xff]
    %s57 = scalar_lea.vmem [#allocation4], 160
    %v58 = vld [vmem:[%s57] ss:$8 sm:$0x3]
    %v59 = vld [vmem:[#allocation2] sm:$0xff]
    %v60 = vld [vmem:[#allocation2 + $0x8] sm:$0xff]
    %v61 = vld [vmem:[#allocation2 + $0x10] sm:$0xff]
    %v62 = vld [vmem:[#allocation2 + $0x18] sm:$0xff]
    %v63 = vld [vmem:[#allocation2 + $0x20] sm:$0xff]
    %v64 = vld [vmem:[#allocation2 + $0x28] sm:$0xff]
    %v65 = vld [vmem:[#allocation2 + $0x30] sm:$0xff]
    %v66 = vld [vmem:[#allocation2 + $0x38] sm:$0xff]
    %vm67 = vcmask 130048
    %v69 = vsel %vm67, %v59, 0
    %v72 = vsel %vm67, %v60, 0
    %v75 = vsel %vm67, %v61, 0
    %v78 = vsel %vm67, %v62, 0
    %v81 = vsel %vm67, %v63, 0
    %v84 = vsel %vm67, %v64, 0
    %v87 = vsel %vm67, %v65, 0
    %v90 = vsel %vm67, %v66, 0
    %92 = vmatprep.subr.mxu0 0.0
    %93 = vmatpush1.msra.mxu0 %v39
    %94 = vmatprep.subr.mxu0 0.0
    %95 = vmatpush1.msra.mxu0 %v40
    %96 = vmatprep.subr.mxu0 0.0
    %97 = vmatpush1.msra.mxu0 0.0
    %98 = vmatprep.subr.mxu0 0.0
    %99 = vmatpush1.msra.mxu0 0.0
    %100 = vmatprep.subr.mxu0 0.0
    %101 = vmatpush1.msra.mxu0 0.0
    %102 = vmatprep.subr.mxu0 0.0
    %103 = vmatpush1.msra.mxu0 0.0
    %104 = vmatprep.subr.mxu0 0.0
    %105 = vmatpush1.msra.mxu0 0.0
    %106 = vmatprep.subr.mxu0 0.0
    %107 = vmatpush1.msra.mxu0 0.0
    %108 = vmatprep.subr.mxu0 0.0
    %109 = vmatpush1.msra.mxu0 0.0
    %110 = vmatprep.subr.mxu0 0.0
    %111 = vmatpush1.msra.mxu0 0.0
    %112 = vmatprep.subr.mxu0 0.0
    %113 = vmatpush1.msra.mxu0 0.0
    %114 = vmatprep.subr.mxu0 0.0
    %115 = vmatpush1.msra.mxu0 0.0
    %116 = vmatprep.subr.mxu0 0.0
    %117 = vmatpush1.msra.mxu0 0.0
    %118 = vmatprep.subr.mxu0 0.0
    %119 = vmatpush1.msra.mxu0 0.0
    %120 = vmatprep.subr.mxu0 0.0
    %121 = vmatpush1.msra.mxu0 0.0
    %122 = vmatprep.subr.mxu0 0.0
    %123 = vmatpush1.msra.mxu0 0.0
    %124 = vmatprep.subr.mxu0 0.0
    %125 = vmatpush1.msra.mxu0 0.0
    %126 = vmatprep.subr.mxu0 0.0
    %127 = vmatpush1.msra.mxu0 0.0
    %128 = vmatprep.subr.mxu0 0.0
    %129 = vmatpush1.msra.mxu0 0.0
    %130 = vmatprep.subr.mxu0 0.0
    %131 = vmatpush1.msra.mxu0 0.0
    %132 = vmatprep.subr.mxu0 0.0
    %133 = vmatpush1.msra.mxu0 0.0
    %134 = vmatprep.subr.mxu0 0.0
    %135 = vmatpush1.msra.mxu0 0.0
    %136 = vmatprep.subr.mxu0 0.0
    %137 = vmatpush1.msra.mxu0 0.0
    %138 = vmatprep.subr.mxu0 0.0
    %139 = vmatpush1.msra.mxu0 0.0
    %140 = vmatprep.subr.mxu0 0.0
    %141 = vmatpush1.msra.mxu0 0.0
    %142 = vmatprep.subr.mxu0 0.0
    %143 = vmatpush1.msra.mxu0 0.0
    %144 = vmatprep.subr.mxu0 0.0
    %145 = vmatpush1.msra.mxu0 0.0
    %146 = vmatprep.subr.mxu0 0.0
    %147 = vmatpush1.msra.mxu0 0.0
    %148 = vmatprep.subr.mxu0 0.0
    %149 = vmatpush1.msra.mxu0 0.0
    %150 = vmatprep.subr.mxu0 0.0
    %151 = vmatpush1.msra.mxu0 0.0
    %152 = vmatprep.subr.mxu0 0.0
    %153 = vmatpush1.msra.mxu0 0.0
    %154 = vmatprep.subr.mxu0 0.0
    %155 = vmatpush1.msra.mxu0 0.0
    %156 = vmatprep.mubr.f32.mxu0 0.0
    %157 = vmatmul.mubr.f32.gmra.mrb[0].mxu0 %v69
    %v158 = vpop.f32.mrb[0].mxu0
    %v159 = vadd.f32 0.0, %v158
    %v160 = vpop.f32.mrb[0].mxu0
    %161 = vmatprep.mubr.f32.mxu0 0.0
    %162 = vmatmul.mubr.f32.gmra.mrb[0].mxu0 %v72
    %v163 = vpop.f32.mrb[0].mxu0
    %v164 = vadd.f32 0.0, %v163
    %v165 = vpop.f32.mrb[0].mxu0
    %166 = vmatprep.mubr.f32.mxu0 0.0
    %167 = vmatmul.mubr.f32.gmra.mrb[0].mxu0 %v75
    %v168 = vpop.f32.mrb[0].mxu0
    %v169 = vadd.f32 0.0, %v168
    %v170 = vpop.f32.mrb[0].mxu0
    %171 = vmatprep.mubr.f32.mxu0 0.0
    %172 = vmatmul.mubr.f32.gmra.mrb[0].mxu0 %v78
    %v173 = vpop.f32.mrb[0].mxu0
    %v174 = vadd.f32 0.0, %v173
    %v175 = vpop.f32.mrb[0].mxu0
    %176 = vmatprep.mubr.f32.mxu0 0.0
    %177 = vmatmul.mubr.f32.gmra.mrb[0].mxu0 %v81
    %v178 = vpop.f32.mrb[0].mxu0
    %v179 = vadd.f32 0.0, %v178
    %v180 = vpop.f32.mrb[0].mxu0
    %181 = vmatprep.mubr.f32.mxu0 0.0
    %182 = vmatmul.mubr.f32.gmra.mrb[0].mxu0 %v84
    %v183 = vpop.f32.mrb[0].mxu0
    %v184 = vadd.f32 0.0, %v183
    %v185 = vpop.f32.mrb[0].mxu0
    %186 = vmatprep.mubr.f32.mxu0 0.0
    %187 = vmatmul.mubr.f32.gmra.mrb[0].mxu0 %v87
    %v188 = vpop.f32.mrb[0].mxu0
    %v189 = vadd.f32 0.0, %v188
    %v190 = vpop.f32.mrb[0].mxu0
    %191 = vmatprep.mubr.f32.mxu0 0.0
    %192 = vmatmul.mubr.f32.gmra.mrb[0].mxu0 %v90
    %v193 = vpop.f32.mrb[0].mxu0
    %v194 = vadd.f32 0.0, %v193
    %v195 = vpop.f32.mrb[0].mxu0
    %196 = vdwg.mxu0
    %v198 = vlaneseq
    %v199 = vshrl.u32 %v198, 7
    %v200 = vsub.s32 0, %v199
    %v201 = vrot.slane %v58, %v200
    %v202 = vlaneseq
    %v203 = vshrl.u32 %v202, 7
    %v204 = vsub.s32 1, %v203
    %v205 = vrot.slane %v58, %v204
    %v208 = vadd.f32 %v201, 0.0
    %v209 = vadd.f32 %v208, %v159
    %v210 = vxor.u32 %v209, 2147483648
    %v211 = vmul.f32 %v210, 1.442695
    %v212 = vpow.pop %v211
    %v213 = vadd.f32 %v212, 1.0
    %v214 = vrcp.pop %v213
    %v215 = vmul.f32 1.0, %v214
    %v216 = vtanh.pop %v209
    %v217 = vmul.f32 %v215, 0.0
    %219 = vrot.lane.b32.xlu0 %v216, 64
    %v220 = vpop.permute.xlu0 %219
    %v222 = vmul.f32 %v215, %v220
    %224 = vrot.lane.b32.xlu0 %v222, 32
    %v225 = vpop.permute.xlu0 %224
    %v227 = vadd.f32 %v217, %v225
    %v228 = vtanh.pop %v227
    %230 = vrot.lane.b32.xlu0 %v228, 64
    %v231 = vpop.permute.xlu0 %230
    %v233 = vmul.f32 %v215, %v231
    %235 = vrot.lane.b32.xlu0 %v233, 32
    %v236 = vpop.permute.xlu0 %235
    %vm238 = vcmask 261120
    %v239 = vsel %vm238, %v236, 0.0
    %vm240 = vcmask 523264
    %v242 = vsel %vm240, %v239, 0
    %244 = vmatprep.subr.mxu0 %v42
    %245 = vmatpush1.msra.mxu0 %v41
    %246 = vmatprep.subr.mxu0 %v44
    %247 = vmatpush1.msra.mxu0 %v43
    %248 = vmatprep.subr.mxu0 %v46
    %249 = vmatpush1.msra.mxu0 %v45
    %250 = vmatprep.subr.mxu0 %v48
    %251 = vmatpush1.msra.mxu0 %v47
    %252 = vmatprep.subr.mxu0 %v50
    %253 = vmatpush1.msra.mxu0 %v49
    %254 = vmatprep.subr.mxu0 %v52
    %255 = vmatpush1.msra.mxu0 %v51
    %256 = vmatprep.subr.mxu0 %v54
    %257 = vmatpush1.msra.mxu0 %v53
    %258 = vmatprep.subr.mxu0 %v56
    %259 = vmatpush1.msra.mxu0 %v55
    %260 = vmatprep.subr.mxu0 0.0
    %261 = vmatpush1.msra.mxu0 0.0
    %262 = vmatprep.subr.mxu0 0.0
    %263 = vmatpush1.msra.mxu0 0.0
    %264 = vmatprep.subr.mxu0 0.0
    %265 = vmatpush1.msra.mxu0 0.0
    %266 = vmatprep.subr.mxu0 0.0
    %267 = vmatpush1.msra.mxu0 0.0
    %268 = vmatprep.subr.mxu0 0.0
    %269 = vmatpush1.msra.mxu0 0.0
    %270 = vmatprep.subr.mxu0 0.0
    %271 = vmatpush1.msra.mxu0 0.0
    %272 = vmatprep.subr.mxu0 0.0
    %273 = vmatpush1.msra.mxu0 0.0
    %274 = vmatprep.subr.mxu0 0.0
    %275 = vmatpush1.msra.mxu0 0.0
    %276 = vmatprep.subr.mxu0 0.0
    %277 = vmatpush1.msra.mxu0 0.0
    %278 = vmatprep.subr.mxu0 0.0
    %279 = vmatpush1.msra.mxu0 0.0
    %280 = vmatprep.subr.mxu0 0.0
    %281 = vmatpush1.msra.mxu0 0.0
    %282 = vmatprep.subr.mxu0 0.0
    %283 = vmatpush1.msra.mxu0 0.0
    %284 = vmatprep.subr.mxu0 0.0
    %285 = vmatpush1.msra.mxu0 0.0
    %286 = vmatprep.subr.mxu0 0.0
    %287 = vmatpush1.msra.mxu0 0.0
    %288 = vmatprep.subr.mxu0 0.0
    %289 = vmatpush1.msra.mxu0 0.0
    %290 = vmatprep.subr.mxu0 0.0
    %291 = vmatpush1.msra.mxu0 0.0
    %292 = vmatprep.subr.mxu0 0.0
    %293 = vmatpush1.msra.mxu0 0.0
    %294 = vmatprep.subr.mxu0 0.0
    %295 = vmatpush1.msra.mxu0 0.0
    %296 = vmatprep.subr.mxu0 0.0
    %297 = vmatpush1.msra.mxu0 0.0
    %298 = vmatprep.subr.mxu0 0.0
    %299 = vmatpush1.msra.mxu0 0.0
    %300 = vmatprep.subr.mxu0 0.0
    %301 = vmatpush1.msra.mxu0 0.0
    %302 = vmatprep.subr.mxu0 0.0
    %303 = vmatpush1.msra.mxu0 0.0
    %304 = vmatprep.subr.mxu0 0.0
    %305 = vmatpush1.msra.mxu0 0.0
    %306 = vmatprep.subr.mxu0 0.0
    %307 = vmatpush1.msra.mxu0 0.0
    %308 = vmatprep.mubr.f32.mxu0 0.0
    %309 = vmatmul.mubr.f32.gmra.mrb[0].mxu0 %v242
    %v310 = vpop.f32.mrb[0].mxu0
    %v311 = vadd.f32 %v201, %v310
    %v312 = vpop.f32.mrb[0].mxu0
    %v313 = vadd.f32 %v205, %v312
    %314 = vdwg.mxu0
    %v315 = vadd.f32 %v311, %v164
    %v316 = vxor.u32 %v315, 2147483648
    %v317 = vmul.f32 %v316, 1.442695
    %v318 = vpow.pop %v317
    %v319 = vadd.f32 %v318, 1.0
    %v320 = vrcp.pop %v319
    %v321 = vmul.f32 1.0, %v320
    %v322 = vtanh.pop %v315
    %v323 = vmul.f32 %v321, %v227
    %325 = vrot.lane.b32.xlu0 %v322, 64
    %v326 = vpop.permute.xlu0 %325
    %v328 = vmul.f32 %v321, %v326
    %330 = vrot.lane.b32.xlu0 %v328, 32
    %v331 = vpop.permute.xlu0 %330
    %v333 = vadd.f32 %v323, %v331
    %v334 = vtanh.pop %v333
    %336 = vrot.lane.b32.xlu0 %v334, 64
    %v337 = vpop.permute.xlu0 %336
    %v339 = vmul.f32 %v321, %v337
    %v340 = vxor.u32 %v313, 2147483648
    %v341 = vmul.f32 %v340, 1.442695
    %v342 = vpow.pop %v341
    %v343 = vadd.f32 %v342, 1.0
    %v344 = vrcp.pop %v343
    %v345 = vmul.f32 1.0, %v344
    %v346 = vtanh.pop %v313
    %v347 = vmul.f32 %v345, 0.0
    %349 = vrot.lane.b32.xlu0 %v346, 64
    %v350 = vpop.permute.xlu0 %349
    %v352 = vmul.f32 %v345, %v350
    %354 = vrot.lane.b32.xlu0 %v352, 32
    %v355 = vpop.permute.xlu0 %354
    %v357 = vadd.f32 %v347, %v355
    %v358 = vtanh.pop %v357
    %360 = vrot.lane.b32.xlu0 %v358, 64
    %v361 = vpop.permute.xlu0 %360
    %v363 = vmul.f32 %v345, %v361
    %365 = vrot.lane.b32.xlu0 %v339, 32
    %v366 = vpop.permute.xlu0 %365
    %369 = vrot.lane.b32.xlu0 %v363, 64
    %v370 = vpop.permute.xlu0 %369
    %v372 = vsel %vm238, %v366, %v370
    %v374 = vsel %vm240, %v372, 0
    %376 = vmatprep.subr.mxu0 %v42
    %377 = vmatpush1.msra.mxu0 %v41
    %378 = vmatprep.subr.mxu0 %v44
    %379 = vmatpush1.msra.mxu0 %v43
    %380 = vmatprep.subr.mxu0 %v46
    %381 = vmatpush1.msra.mxu0 %v45
    %382 = vmatprep.subr.mxu0 %v48
    %383 = vmatpush1.msra.mxu0 %v47
    %384 = vmatprep.subr.mxu0 %v50
    %385 = vmatpush1.msra.mxu0 %v49
    %386 = vmatprep.subr.mxu0 %v52
    %387 = vmatpush1.msra.mxu0 %v51
    %388 = vmatprep.subr.mxu0 %v54
    %389 = vmatpush1.msra.mxu0 %v53
    %390 = vmatprep.subr.mxu0 %v56
    %391 = vmatpush1.msra.mxu0 %v55
    %392 = vmatprep.subr.mxu0 0.0
    %393 = vmatpush1.msra.mxu0 0.0
    %394 = vmatprep.subr.mxu0 0.0
    %395 = vmatpush1.msra.mxu0 0.0
    %396 = vmatprep.subr.mxu0 0.0
    %397 = vmatpush1.msra.mxu0 0.0
    %398 = vmatprep.subr.mxu0 0.0
    %399 = vmatpush1.msra.mxu0 0.0
    %400 = vmatprep.subr.mxu0 0.0
    %401 = vmatpush1.msra.mxu0 0.0
    %402 = vmatprep.subr.mxu0 0.0
    %403 = vmatpush1.msra.mxu0 0.0
    %404 = vmatprep.subr.mxu0 0.0
    %405 = vmatpush1.msra.mxu0 0.0
    %406 = vmatprep.subr.mxu0 0.0
    %407 = vmatpush1.msra.mxu0 0.0
    %408 = vmatprep.subr.mxu0 0.0
    %409 = vmatpush1.msra.mxu0 0.0
    %410 = vmatprep.subr.mxu0 0.0
    %411 = vmatpush1.msra.mxu0 0.0
    %412 = vmatprep.subr.mxu0 0.0
    %413 = vmatpush1.msra.mxu0 0.0
    %414 = vmatprep.subr.mxu0 0.0
    %415 = vmatpush1.msra.mxu0 0.0
    %416 = vmatprep.subr.mxu0 0.0
    %417 = vmatpush1.msra.mxu0 0.0
    %418 = vmatprep.subr.mxu0 0.0
    %419 = vmatpush1.msra.mxu0 0.0
    %420 = vmatprep.subr.mxu0 0.0
    %421 = vmatpush1.msra.mxu0 0.0
    %422 = vmatprep.subr.mxu0 0.0
    %423 = vmatpush1.msra.mxu0 0.0
    %424 = vmatprep.subr.mxu0 0.0
    %425 = vmatpush1.msra.mxu0 0.0
    %426 = vmatprep.subr.mxu0 0.0
    %427 = vmatpush1.msra.mxu0 0.0
    %428 = vmatprep.subr.mxu0 0.0
    %429 = vmatpush1.msra.mxu0 0.0
    %430 = vmatprep.subr.mxu0 0.0
    %431 = vmatpush1.msra.mxu0 0.0
    %432 = vmatprep.subr.mxu0 0.0
    %433 = vmatpush1.msra.mxu0 0.0
    %434 = vmatprep.subr.mxu0 0.0
    %435 = vmatpush1.msra.mxu0 0.0
    %436 = vmatprep.subr.mxu0 0.0
    %437 = vmatpush1.msra.mxu0 0.0
    %438 = vmatprep.subr.mxu0 0.0
    %439 = vmatpush1.msra.mxu0 0.0
    %440 = vmatprep.mubr.f32.mxu0 0.0
    %441 = vmatmul.mubr.f32.gmra.mrb[0].mxu0 %v374
    %v442 = vpop.f32.mrb[0].mxu0
    %v443 = vadd.f32 %v201, %v442
    %v444 = vpop.f32.mrb[0].mxu0
    %v445 = vadd.f32 %v205, %v444
    %446 = vdwg.mxu0
    %v447 = vadd.f32 %v443, %v169
    %v448 = vxor.u32 %v447, 2147483648
    %v449 = vmul.f32 %v448, 1.442695
    %v450 = vpow.pop %v449
    %v451 = vadd.f32 %v450, 1.0
    %v452 = vrcp.pop %v451
    %v453 = vmul.f32 1.0, %v452
    %v454 = vtanh.pop %v447
    %v455 = vmul.f32 %v453, %v333
    %457 = vrot.lane.b32.xlu0 %v454, 64
    %v458 = vpop.permute.xlu0 %457
    %v460 = vmul.f32 %v453, %v458
    %462 = vrot.lane.b32.xlu0 %v460, 32
    %v463 = vpop.permute.xlu0 %462
    %v465 = vadd.f32 %v455, %v463
    %v466 = vtanh.pop %v465
    %468 = vrot.lane.b32.xlu0 %v466, 64
    %v469 = vpop.permute.xlu0 %468
    %v471 = vmul.f32 %v453, %v469
    %v472 = vxor.u32 %v445, 2147483648
    %v473 = vmul.f32 %v472, 1.442695
    %v474 = vpow.pop %v473
    %v475 = vadd.f32 %v474, 1.0
    %v476 = vrcp.pop %v475
    %v477 = vmul.f32 1.0, %v476
    %v478 = vtanh.pop %v445
    %v479 = vmul.f32 %v477, %v357
    %481 = vrot.lane.b32.xlu0 %v478, 64
    %v482 = vpop.permute.xlu0 %481
    %v484 = vmul.f32 %v477, %v482
    %486 = vrot.lane.b32.xlu0 %v484, 32
    %v487 = vpop.permute.xlu0 %486
    %v489 = vadd.f32 %v479, %v487
    %v490 = vtanh.pop %v489
    %492 = vrot.lane.b32.xlu0 %v490, 64
    %v493 = vpop.permute.xlu0 %492
    %v495 = vmul.f32 %v477, %v493
    %497 = vrot.lane.b32.xlu0 %v471, 32
    %v498 = vpop.permute.xlu0 %497
    %501 = vrot.lane.b32.xlu0 %v495, 64
    %v502 = vpop.permute.xlu0 %501
    %v504 = vsel %vm238, %v498, %v502
    %v506 = vsel %vm240, %v504, 0
    %508 = vmatprep.subr.mxu0 %v42
    %509 = vmatpush1.msra.mxu0 %v41
    %510 = vmatprep.subr.mxu0 %v44
    %511 = vmatpush1.msra.mxu0 %v43
    %512 = vmatprep.subr.mxu0 %v46
    %513 = vmatpush1.msra.mxu0 %v45
    %514 = vmatprep.subr.mxu0 %v48
    %515 = vmatpush1.msra.mxu0 %v47
    %516 = vmatprep.subr.mxu0 %v50
    %517 = vmatpush1.msra.mxu0 %v49
    %518 = vmatprep.subr.mxu0 %v52
    %519 = vmatpush1.msra.mxu0 %v51
    %520 = vmatprep.subr.mxu0 %v54
    %521 = vmatpush1.msra.mxu0 %v53
    %522 = vmatprep.subr.mxu0 %v56
    %523 = vmatpush1.msra.mxu0 %v55
    %524 = vmatprep.subr.mxu0 0.0
    %525 = vmatpush1.msra.mxu0 0.0
    %526 = vmatprep.subr.mxu0 0.0
    %527 = vmatpush1.msra.mxu0 0.0
    %528 = vmatprep.subr.mxu0 0.0
    %529 = vmatpush1.msra.mxu0 0.0
    %530 = vmatprep.subr.mxu0 0.0
    %531 = vmatpush1.msra.mxu0 0.0
    %532 = vmatprep.subr.mxu0 0.0
    %533 = vmatpush1.msra.mxu0 0.0
    %534 = vmatprep.subr.mxu0 0.0
    %535 = vmatpush1.msra.mxu0 0.0
    %536 = vmatprep.subr.mxu0 0.0
    %537 = vmatpush1.msra.mxu0 0.0
    %538 = vmatprep.subr.mxu0 0.0
    %539 = vmatpush1.msra.mxu0 0.0
    %540 = vmatprep.subr.mxu0 0.0
    %541 = vmatpush1.msra.mxu0 0.0
    %542 = vmatprep.subr.mxu0 0.0
    %543 = vmatpush1.msra.mxu0 0.0
    %544 = vmatprep.subr.mxu0 0.0
    %545 = vmatpush1.msra.mxu0 0.0
    %546 = vmatprep.subr.mxu0 0.0
    %547 = vmatpush1.msra.mxu0 0.0
    %548 = vmatprep.subr.mxu0 0.0
    %549 = vmatpush1.msra.mxu0 0.0
    %550 = vmatprep.subr.mxu0 0.0
    %551 = vmatpush1.msra.mxu0 0.0
    %552 = vmatprep.subr.mxu0 0.0
    %553 = vmatpush1.msra.mxu0 0.0
    %554 = vmatprep.subr.mxu0 0.0
    %555 = vmatpush1.msra.mxu0 0.0
    %556 = vmatprep.subr.mxu0 0.0
    %557 = vmatpush1.msra.mxu0 0.0
    %558 = vmatprep.subr.mxu0 0.0
    %559 = vmatpush1.msra.mxu0 0.0
    %560 = vmatprep.subr.mxu0 0.0
    %561 = vmatpush1.msra.mxu0 0.0
    %562 = vmatprep.subr.mxu0 0.0
    %563 = vmatpush1.msra.mxu0 0.0
    %564 = vmatprep.subr.mxu0 0.0
    %565 = vmatpush1.msra.mxu0 0.0
    %566 = vmatprep.subr.mxu0 0.0
    %567 = vmatpush1.msra.mxu0 0.0
    %568 = vmatprep.subr.mxu0 0.0
    %569 = vmatpush1.msra.mxu0 0.0
    %570 = vmatprep.subr.mxu0 0.0
    %571 = vmatpush1.msra.mxu0 0.0
    %572 = vmatprep.mubr.f32.mxu0 0.0
    %573 = vmatmul.mubr.f32.gmra.mrb[0].mxu0 %v506
    %v574 = vpop.f32.mrb[0].mxu0
    %v575 = vadd.f32 %v201, %v574
    %v576 = vpop.f32.mrb[0].mxu0
    %v577 = vadd.f32 %v205, %v576
    %578 = vdwg.mxu0
    %v579 = vadd.f32 %v575, %v174
    %v580 = vxor.u32 %v579, 2147483648
    %v581 = vmul.f32 %v580, 1.442695
    %v582 = vpow.pop %v581
    %v583 = vadd.f32 %v582, 1.0
    %v584 = vrcp.pop %v583
    %v585 = vmul.f32 1.0, %v584
    %v586 = vtanh.pop %v579
    %v587 = vmul.f32 %v585, %v465
    %589 = vrot.lane.b32.xlu0 %v586, 64
    %v590 = vpop.permute.xlu0 %589
    %v592 = vmul.f32 %v585, %v590
    %594 = vrot.lane.b32.xlu0 %v592, 32
    %v595 = vpop.permute.xlu0 %594
    %v597 = vadd.f32 %v587, %v595
    %v598 = vtanh.pop %v597
    %600 = vrot.lane.b32.xlu0 %v598, 64
    %v601 = vpop.permute.xlu0 %600
    %v603 = vmul.f32 %v585, %v601
    %v604 = vxor.u32 %v577, 2147483648
    %v605 = vmul.f32 %v604, 1.442695
    %v606 = vpow.pop %v605
    %v607 = vadd.f32 %v606, 1.0
    %v608 = vrcp.pop %v607
    %v609 = vmul.f32 1.0, %v608
    %v610 = vtanh.pop %v577
    %v611 = vmul.f32 %v609, %v489
    %613 = vrot.lane.b32.xlu0 %v610, 64
    %v614 = vpop.permute.xlu0 %613
    %v616 = vmul.f32 %v609, %v614
    %618 = vrot.lane.b32.xlu0 %v616, 32
    %v619 = vpop.permute.xlu0 %618
    %v621 = vadd.f32 %v611, %v619
    %v622 = vtanh.pop %v621
    %624 = vrot.lane.b32.xlu0 %v622, 64
    %v625 = vpop.permute.xlu0 %624
    %v627 = vmul.f32 %v609, %v625
    %629 = vrot.lane.b32.xlu0 %v603, 32
    %v630 = vpop.permute.xlu0 %629
    %633 = vrot.lane.b32.xlu0 %v627, 64
    %v634 = vpop.permute.xlu0 %633
    %v636 = vsel %vm238, %v630, %v634
    %v638 = vsel %vm240, %v636, 0
    %640 = vmatprep.subr.mxu0 %v42
    %641 = vmatpush1.msra.mxu0 %v41
    %642 = vmatprep.subr.mxu0 %v44
    %643 = vmatpush1.msra.mxu0 %v43
    %644 = vmatprep.subr.mxu0 %v46
    %645 = vmatpush1.msra.mxu0 %v45
    %646 = vmatprep.subr.mxu0 %v48
    %647 = vmatpush1.msra.mxu0 %v47
    %648 = vmatprep.subr.mxu0 %v50
    %649 = vmatpush1.msra.mxu0 %v49
    %650 = vmatprep.subr.mxu0 %v52
    %651 = vmatpush1.msra.mxu0 %v51
    %652 = vmatprep.subr.mxu0 %v54
    %653 = vmatpush1.msra.mxu0 %v53
    %654 = vmatprep.subr.mxu0 %v56
    %655 = vmatpush1.msra.mxu0 %v55
    %656 = vmatprep.subr.mxu0 0.0
    %657 = vmatpush1.msra.mxu0 0.0
    %658 = vmatprep.subr.mxu0 0.0
    %659 = vmatpush1.msra.mxu0 0.0
    %660 = vmatprep.subr.mxu0 0.0
    %661 = vmatpush1.msra.mxu0 0.0
    %662 = vmatprep.subr.mxu0 0.0
    %663 = vmatpush1.msra.mxu0 0.0
    %664 = vmatprep.subr.mxu0 0.0
    %665 = vmatpush1.msra.mxu0 0.0
    %666 = vmatprep.subr.mxu0 0.0
    %667 = vmatpush1.msra.mxu0 0.0
    %668 = vmatprep.subr.mxu0 0.0
    %669 = vmatpush1.msra.mxu0 0.0
    %670 = vmatprep.subr.mxu0 0.0
    %671 = vmatpush1.msra.mxu0 0.0
    %672 = vmatprep.subr.mxu0 0.0
    %673 = vmatpush1.msra.mxu0 0.0
    %674 = vmatprep.subr.mxu0 0.0
    %675 = vmatpush1.msra.mxu0 0.0
    %676 = vmatprep.subr.mxu0 0.0
    %677 = vmatpush1.msra.mxu0 0.0
    %678 = vmatprep.subr.mxu0 0.0
    %679 = vmatpush1.msra.mxu0 0.0
    %680 = vmatprep.subr.mxu0 0.0
    %681 = vmatpush1.msra.mxu0 0.0
    %682 = vmatprep.subr.mxu0 0.0
    %683 = vmatpush1.msra.mxu0 0.0
    %684 = vmatprep.subr.mxu0 0.0
    %685 = vmatpush1.msra.mxu0 0.0
    %686 = vmatprep.subr.mxu0 0.0
    %687 = vmatpush1.msra.mxu0 0.0
    %688 = vmatprep.subr.mxu0 0.0
    %689 = vmatpush1.msra.mxu0 0.0
    %690 = vmatprep.subr.mxu0 0.0
    %691 = vmatpush1.msra.mxu0 0.0
    %692 = vmatprep.subr.mxu0 0.0
    %693 = vmatpush1.msra.mxu0 0.0
    %694 = vmatprep.subr.mxu0 0.0
    %695 = vmatpush1.msra.mxu0 0.0
    %696 = vmatprep.subr.mxu0 0.0
    %697 = vmatpush1.msra.mxu0 0.0
    %698 = vmatprep.subr.mxu0 0.0
    %699 = vmatpush1.msra.mxu0 0.0
    %700 = vmatprep.subr.mxu0 0.0
    %701 = vmatpush1.msra.mxu0 0.0
    %702 = vmatprep.subr.mxu0 0.0
    %703 = vmatpush1.msra.mxu0 0.0
    %704 = vmatprep.mubr.f32.mxu0 0.0
    %705 = vmatmul.mubr.f32.gmra.mrb[0].mxu0 %v638
    %v706 = vpop.f32.mrb[0].mxu0
    %v707 = vadd.f32 %v201, %v706
    %v708 = vpop.f32.mrb[0].mxu0
    %v709 = vadd.f32 %v205, %v708
    %710 = vdwg.mxu0
    %v711 = vadd.f32 %v707, %v179
    %v712 = vxor.u32 %v711, 2147483648
    %v713 = vmul.f32 %v712, 1.442695
    %v714 = vpow.pop %v713
    %v715 = vadd.f32 %v714, 1.0
    %v716 = vrcp.pop %v715
    %v717 = vmul.f32 1.0, %v716
    %v718 = vtanh.pop %v711
    %v719 = vmul.f32 %v717, %v597
    %721 = vrot.lane.b32.xlu0 %v718, 64
    %v722 = vpop.permute.xlu0 %721
    %v724 = vmul.f32 %v717, %v722
    %726 = vrot.lane.b32.xlu0 %v724, 32
    %v727 = vpop.permute.xlu0 %726
    %v729 = vadd.f32 %v719, %v727
    %v730 = vtanh.pop %v729
    %732 = vrot.lane.b32.xlu0 %v730, 64
    %v733 = vpop.permute.xlu0 %732
    %v735 = vmul.f32 %v717, %v733
    %v736 = vxor.u32 %v709, 2147483648
    %v737 = vmul.f32 %v736, 1.442695
    %v738 = vpow.pop %v737
    %v739 = vadd.f32 %v738, 1.0
    %v740 = vrcp.pop %v739
    %v741 = vmul.f32 1.0, %v740
    %v742 = vtanh.pop %v709
    %v743 = vmul.f32 %v741, %v621
    %745 = vrot.lane.b32.xlu0 %v742, 64
    %v746 = vpop.permute.xlu0 %745
    %v748 = vmul.f32 %v741, %v746
    %750 = vrot.lane.b32.xlu0 %v748, 32
    %v751 = vpop.permute.xlu0 %750
    %v753 = vadd.f32 %v743, %v751
    %v754 = vtanh.pop %v753
    %756 = vrot.lane.b32.xlu0 %v754, 64
    %v757 = vpop.permute.xlu0 %756
    %v759 = vmul.f32 %v741, %v757
    %761 = vrot.lane.b32.xlu0 %v735, 32
    %v762 = vpop.permute.xlu0 %761
    %765 = vrot.lane.b32.xlu0 %v759, 64
    %v766 = vpop.permute.xlu0 %765
    %v768 = vsel %vm238, %v762, %v766
    %v770 = vsel %vm240, %v768, 0
    %772 = vmatprep.subr.mxu0 %v42
    %773 = vmatpush1.msra.mxu0 %v41
    %774 = vmatprep.subr.mxu0 %v44
    %775 = vmatpush1.msra.mxu0 %v43
    %776 = vmatprep.subr.mxu0 %v46
    %777 = vmatpush1.msra.mxu0 %v45
    %778 = vmatprep.subr.mxu0 %v48
    %779 = vmatpush1.msra.mxu0 %v47
    %780 = vmatprep.subr.mxu0 %v50
    %781 = vmatpush1.msra.mxu0 %v49
    %782 = vmatprep.subr.mxu0 %v52
    %783 = vmatpush1.msra.mxu0 %v51
    %784 = vmatprep.subr.mxu0 %v54
    %785 = vmatpush1.msra.mxu0 %v53
    %786 = vmatprep.subr.mxu0 %v56
    %787 = vmatpush1.msra.mxu0 %v55
    %788 = vmatprep.subr.mxu0 0.0
    %789 = vmatpush1.msra.mxu0 0.0
    %790 = vmatprep.subr.mxu0 0.0
    %791 = vmatpush1.msra.mxu0 0.0
    %792 = vmatprep.subr.mxu0 0.0
    %793 = vmatpush1.msra.mxu0 0.0
    %794 = vmatprep.subr.mxu0 0.0
    %795 = vmatpush1.msra.mxu0 0.0
    %796 = vmatprep.subr.mxu0 0.0
    %797 = vmatpush1.msra.mxu0 0.0
    %798 = vmatprep.subr.mxu0 0.0
    %799 = vmatpush1.msra.mxu0 0.0
    %800 = vmatprep.subr.mxu0 0.0
    %801 = vmatpush1.msra.mxu0 0.0
    %802 = vmatprep.subr.mxu0 0.0
    %803 = vmatpush1.msra.mxu0 0.0
    %804 = vmatprep.subr.mxu0 0.0
    %805 = vmatpush1.msra.mxu0 0.0
    %806 = vmatprep.subr.mxu0 0.0
    %807 = vmatpush1.msra.mxu0 0.0
    %808 = vmatprep.subr.mxu0 0.0
    %809 = vmatpush1.msra.mxu0 0.0
    %810 = vmatprep.subr.mxu0 0.0
    %811 = vmatpush1.msra.mxu0 0.0
    %812 = vmatprep.subr.mxu0 0.0
    %813 = vmatpush1.msra.mxu0 0.0
    %814 = vmatprep.subr.mxu0 0.0
    %815 = vmatpush1.msra.mxu0 0.0
    %816 = vmatprep.subr.mxu0 0.0
    %817 = vmatpush1.msra.mxu0 0.0
    %818 = vmatprep.subr.mxu0 0.0
    %819 = vmatpush1.msra.mxu0 0.0
    %820 = vmatprep.subr.mxu0 0.0
    %821 = vmatpush1.msra.mxu0 0.0
    %822 = vmatprep.subr.mxu0 0.0
    %823 = vmatpush1.msra.mxu0 0.0
    %824 = vmatprep.subr.mxu0 0.0
    %825 = vmatpush1.msra.mxu0 0.0
    %826 = vmatprep.subr.mxu0 0.0
    %827 = vmatpush1.msra.mxu0 0.0
    %828 = vmatprep.subr.mxu0 0.0
    %829 = vmatpush1.msra.mxu0 0.0
    %830 = vmatprep.subr.mxu0 0.0
    %831 = vmatpush1.msra.mxu0 0.0
    %832 = vmatprep.subr.mxu0 0.0
    %833 = vmatpush1.msra.mxu0 0.0
    %834 = vmatprep.subr.mxu0 0.0
    %835 = vmatpush1.msra.mxu0 0.0
    %836 = vmatprep.mubr.f32.mxu0 0.0
    %837 = vmatmul.mubr.f32.gmra.mrb[0].mxu0 %v770
    %v838 = vpop.f32.mrb[0].mxu0
    %v839 = vadd.f32 %v201, %v838
    %v840 = vpop.f32.mrb[0].mxu0
    %v841 = vadd.f32 %v205, %v840
    %842 = vdwg.mxu0
    %v843 = vadd.f32 %v839, %v184
    %v844 = vxor.u32 %v843, 2147483648
    %v845 = vmul.f32 %v844, 1.442695
    %v846 = vpow.pop %v845
    %v847 = vadd.f32 %v846, 1.0
    %v848 = vrcp.pop %v847
    %v849 = vmul.f32 1.0, %v848
    %v850 = vtanh.pop %v843
    %v851 = vmul.f32 %v849, %v729
    %853 = vrot.lane.b32.xlu0 %v850, 64
    %v854 = vpop.permute.xlu0 %853
    %v856 = vmul.f32 %v849, %v854
    %858 = vrot.lane.b32.xlu0 %v856, 32
    %v859 = vpop.permute.xlu0 %858
    %v861 = vadd.f32 %v851, %v859
    %v862 = vtanh.pop %v861
    %864 = vrot.lane.b32.xlu0 %v862, 64
    %v865 = vpop.permute.xlu0 %864
    %v867 = vmul.f32 %v849, %v865
    %v868 = vxor.u32 %v841, 2147483648
    %v869 = vmul.f32 %v868, 1.442695
    %v870 = vpow.pop %v869
    %v871 = vadd.f32 %v870, 1.0
    %v872 = vrcp.pop %v871
    %v873 = vmul.f32 1.0, %v872
    %v874 = vtanh.pop %v841
    %v875 = vmul.f32 %v873, %v753
    %877 = vrot.lane.b32.xlu0 %v874, 64
    %v878 = vpop.permute.xlu0 %877
    %v880 = vmul.f32 %v873, %v878
    %882 = vrot.lane.b32.xlu0 %v880, 32
    %v883 = vpop.permute.xlu0 %882
    %v885 = vadd.f32 %v875, %v883
    %v886 = vtanh.pop %v885
    %888 = vrot.lane.b32.xlu0 %v886, 64
    %v889 = vpop.permute.xlu0 %888
    %v891 = vmul.f32 %v873, %v889
    %893 = vrot.lane.b32.xlu0 %v867, 32
    %v894 = vpop.permute.xlu0 %893
    %897 = vrot.lane.b32.xlu0 %v891, 64
    %v898 = vpop.permute.xlu0 %897
    %v900 = vsel %vm238, %v894, %v898
    %v902 = vsel %vm240, %v900, 0
    %904 = vmatprep.subr.mxu0 %v42
    %905 = vmatpush1.msra.mxu0 %v41
    %906 = vmatprep.subr.mxu0 %v44
    %907 = vmatpush1.msra.mxu0 %v43
    %908 = vmatprep.subr.mxu0 %v46
    %909 = vmatpush1.msra.mxu0 %v45
    %910 = vmatprep.subr.mxu0 %v48
    %911 = vmatpush1.msra.mxu0 %v47
    %912 = vmatprep.subr.mxu0 %v50
    %913 = vmatpush1.msra.mxu0 %v49
    %914 = vmatprep.subr.mxu0 %v52
    %915 = vmatpush1.msra.mxu0 %v51
    %916 = vmatprep.subr.mxu0 %v54
    %917 = vmatpush1.msra.mxu0 %v53
    %918 = vmatprep.subr.mxu0 %v56
    %919 = vmatpush1.msra.mxu0 %v55
    %920 = vmatprep.subr.mxu0 0.0
    %921 = vmatpush1.msra.mxu0 0.0
    %922 = vmatprep.subr.mxu0 0.0
    %923 = vmatpush1.msra.mxu0 0.0
    %924 = vmatprep.subr.mxu0 0.0
    %925 = vmatpush1.msra.mxu0 0.0
    %926 = vmatprep.subr.mxu0 0.0
    %927 = vmatpush1.msra.mxu0 0.0
    %928 = vmatprep.subr.mxu0 0.0
    %929 = vmatpush1.msra.mxu0 0.0
    %930 = vmatprep.subr.mxu0 0.0
    %931 = vmatpush1.msra.mxu0 0.0
    %932 = vmatprep.subr.mxu0 0.0
    %933 = vmatpush1.msra.mxu0 0.0
    %934 = vmatprep.subr.mxu0 0.0
    %935 = vmatpush1.msra.mxu0 0.0
    %936 = vmatprep.subr.mxu0 0.0
    %937 = vmatpush1.msra.mxu0 0.0
    %938 = vmatprep.subr.mxu0 0.0
    %939 = vmatpush1.msra.mxu0 0.0
    %940 = vmatprep.subr.mxu0 0.0
    %941 = vmatpush1.msra.mxu0 0.0
    %942 = vmatprep.subr.mxu0 0.0
    %943 = vmatpush1.msra.mxu0 0.0
    %944 = vmatprep.subr.mxu0 0.0
    %945 = vmatpush1.msra.mxu0 0.0
    %946 = vmatprep.subr.mxu0 0.0
    %947 = vmatpush1.msra.mxu0 0.0
    %948 = vmatprep.subr.mxu0 0.0
    %949 = vmatpush1.msra.mxu0 0.0
    %950 = vmatprep.subr.mxu0 0.0
    %951 = vmatpush1.msra.mxu0 0.0
    %952 = vmatprep.subr.mxu0 0.0
    %953 = vmatpush1.msra.mxu0 0.0
    %954 = vmatprep.subr.mxu0 0.0
    %955 = vmatpush1.msra.mxu0 0.0
    %956 = vmatprep.subr.mxu0 0.0
    %957 = vmatpush1.msra.mxu0 0.0
    %958 = vmatprep.subr.mxu0 0.0
    %959 = vmatpush1.msra.mxu0 0.0
    %960 = vmatprep.subr.mxu0 0.0
    %961 = vmatpush1.msra.mxu0 0.0
    %962 = vmatprep.subr.mxu0 0.0
    %963 = vmatpush1.msra.mxu0 0.0
    %964 = vmatprep.subr.mxu0 0.0
    %965 = vmatpush1.msra.mxu0 0.0
    %966 = vmatprep.subr.mxu0 0.0
    %967 = vmatpush1.msra.mxu0 0.0
    %968 = vmatprep.mubr.f32.mxu0 0.0
    %969 = vmatmul.mubr.f32.gmra.mrb[0].mxu0 %v902
    %v970 = vpop.f32.mrb[0].mxu0
    %v971 = vadd.f32 %v201, %v970
    %v972 = vpop.f32.mrb[0].mxu0
    %v973 = vadd.f32 %v205, %v972
    %974 = vdwg.mxu0
    %v975 = vadd.f32 %v971, %v189
    %v976 = vxor.u32 %v975, 2147483648
    %v977 = vmul.f32 %v976, 1.442695
    %v978 = vpow.pop %v977
    %v979 = vadd.f32 %v978, 1.0
    %v980 = vrcp.pop %v979
    %v981 = vmul.f32 1.0, %v980
    %v982 = vtanh.pop %v975
    %v983 = vmul.f32 %v981, %v861
    %985 = vrot.lane.b32.xlu0 %v982, 64
    %v986 = vpop.permute.xlu0 %985
    %v988 = vmul.f32 %v981, %v986
    %990 = vrot.lane.b32.xlu0 %v988, 32
    %v991 = vpop.permute.xlu0 %990
    %v993 = vadd.f32 %v983, %v991
    %v994 = vtanh.pop %v993
    %996 = vrot.lane.b32.xlu0 %v994, 64
    %v997 = vpop.permute.xlu0 %996
    %v999 = vmul.f32 %v981, %v997
    %v1000 = vxor.u32 %v973, 2147483648
    %v1001 = vmul.f32 %v1000, 1.442695
    %v1002 = vpow.pop %v1001
    %v1003 = vadd.f32 %v1002, 1.0
    %v1004 = vrcp.pop %v1003
    %v1005 = vmul.f32 1.0, %v1004
    %v1006 = vtanh.pop %v973
    %v1007 = vmul.f32 %v1005, %v885
    %1009 = vrot.lane.b32.xlu0 %v1006, 64
    %v1010 = vpop.permute.xlu0 %1009
    %v1012 = vmul.f32 %v1005, %v1010
    %1014 = vrot.lane.b32.xlu0 %v1012, 32
    %v1015 = vpop.permute.xlu0 %1014
    %v1017 = vadd.f32 %v1007, %v1015
    %v1018 = vtanh.pop %v1017
    %1020 = vrot.lane.b32.xlu0 %v1018, 64
    %v1021 = vpop.permute.xlu0 %1020
    %v1023 = vmul.f32 %v1005, %v1021
    %1025 = vrot.lane.b32.xlu0 %v999, 32
    %v1026 = vpop.permute.xlu0 %1025
    %1029 = vrot.lane.b32.xlu0 %v1023, 64
    %v1030 = vpop.permute.xlu0 %1029
    %v1032 = vsel %vm238, %v1026, %v1030
    %v1034 = vsel %vm240, %v1032, 0
    %1036 = vmatprep.subr.mxu0 %v42
    %1037 = vmatpush1.msra.mxu0 %v41
    %1038 = vmatprep.subr.mxu0 %v44
    %1039 = vmatpush1.msra.mxu0 %v43
    %1040 = vmatprep.subr.mxu0 %v46
    %1041 = vmatpush1.msra.mxu0 %v45
    %1042 = vmatprep.subr.mxu0 %v48
    %1043 = vmatpush1.msra.mxu0 %v47
    %1044 = vmatprep.subr.mxu0 %v50
    %1045 = vmatpush1.msra.mxu0 %v49
    %1046 = vmatprep.subr.mxu0 %v52
    %1047 = vmatpush1.msra.mxu0 %v51
    %1048 = vmatprep.subr.mxu0 %v54
    %1049 = vmatpush1.msra.mxu0 %v53
    %1050 = vmatprep.subr.mxu0 %v56
    %1051 = vmatpush1.msra.mxu0 %v55
    %1052 = vmatprep.subr.mxu0 0.0
    %1053 = vmatpush1.msra.mxu0 0.0
    %1054 = vmatprep.subr.mxu0 0.0
    %1055 = vmatpush1.msra.mxu0 0.0
    %1056 = vmatprep.subr.mxu0 0.0
    %1057 = vmatpush1.msra.mxu0 0.0
    %1058 = vmatprep.subr.mxu0 0.0
    %1059 = vmatpush1.msra.mxu0 0.0
    %1060 = vmatprep.subr.mxu0 0.0
    %1061 = vmatpush1.msra.mxu0 0.0
    %1062 = vmatprep.subr.mxu0 0.0
    %1063 = vmatpush1.msra.mxu0 0.0
    %1064 = vmatprep.subr.mxu0 0.0
    %1065 = vmatpush1.msra.mxu0 0.0
    %1066 = vmatprep.subr.mxu0 0.0
    %1067 = vmatpush1.msra.mxu0 0.0
    %1068 = vmatprep.subr.mxu0 0.0
    %1069 = vmatpush1.msra.mxu0 0.0
    %1070 = vmatprep.subr.mxu0 0.0
    %1071 = vmatpush1.msra.mxu0 0.0
    %1072 = vmatprep.subr.mxu0 0.0
    %1073 = vmatpush1.msra.mxu0 0.0
    %1074 = vmatprep.subr.mxu0 0.0
    %1075 = vmatpush1.msra.mxu0 0.0
    %1076 = vmatprep.subr.mxu0 0.0
    %1077 = vmatpush1.msra.mxu0 0.0
    %1078 = vmatprep.subr.mxu0 0.0
    %1079 = vmatpush1.msra.mxu0 0.0
    %1080 = vmatprep.subr.mxu0 0.0
    %1081 = vmatpush1.msra.mxu0 0.0
    %1082 = vmatprep.subr.mxu0 0.0
    %1083 = vmatpush1.msra.mxu0 0.0
    %1084 = vmatprep.subr.mxu0 0.0
    %1085 = vmatpush1.msra.mxu0 0.0
    %1086 = vmatprep.subr.mxu0 0.0
    %1087 = vmatpush1.msra.mxu0 0.0
    %1088 = vmatprep.subr.mxu0 0.0
    %1089 = vmatpush1.msra.mxu0 0.0
    %1090 = vmatprep.subr.mxu0 0.0
    %1091 = vmatpush1.msra.mxu0 0.0
    %1092 = vmatprep.subr.mxu0 0.0
    %1093 = vmatpush1.msra.mxu0 0.0
    %1094 = vmatprep.subr.mxu0 0.0
    %1095 = vmatpush1.msra.mxu0 0.0
    %1096 = vmatprep.subr.mxu0 0.0
    %1097 = vmatpush1.msra.mxu0 0.0
    %1098 = vmatprep.subr.mxu0 0.0
    %1099 = vmatpush1.msra.mxu0 0.0
    %1100 = vmatprep.mubr.f32.mxu0 0.0
    %1101 = vmatmul.mubr.f32.gmra.mrb[0].mxu0 %v1034
    %v1102 = vpop.f32.mrb[0].mxu0
    %v1103 = vadd.f32 %v201, %v1102
    %v1104 = vpop.f32.mrb[0].mxu0
    %v1105 = vadd.f32 %v205, %v1104
    %1106 = vdwg.mxu0
    %v1107 = vadd.f32 %v1103, %v194
    %v1108 = vxor.u32 %v1107, 2147483648
    %v1109 = vmul.f32 %v1108, 1.442695
    %v1110 = vpow.pop %v1109
    %v1111 = vadd.f32 %v1110, 1.0
    %v1112 = vrcp.pop %v1111
    %v1113 = vmul.f32 1.0, %v1112
    %v1114 = vtanh.pop %v1107
    %v1115 = vmul.f32 %v1113, %v993
    %1117 = vrot.lane.b32.xlu0 %v1114, 64
    %v1118 = vpop.permute.xlu0 %1117
    %v1120 = vmul.f32 %v1113, %v1118
    %1122 = vrot.lane.b32.xlu0 %v1120, 32
    %v1123 = vpop.permute.xlu0 %1122
    %v1125 = vadd.f32 %v1115, %v1123
    %v1126 = vtanh.pop %v1125
    %1128 = vrot.lane.b32.xlu0 %v1126, 64
    %v1129 = vpop.permute.xlu0 %1128
    %v1131 = vmul.f32 %v1113, %v1129
    %v1132 = vxor.u32 %v1105, 2147483648
    %v1133 = vmul.f32 %v1132, 1.442695
    %v1134 = vpow.pop %v1133
    %v1135 = vadd.f32 %v1134, 1.0
    %v1136 = vrcp.pop %v1135
    %v1137 = vmul.f32 1.0, %v1136
    %v1138 = vtanh.pop %v1105
    %v1139 = vmul.f32 %v1137, %v1017
    %1141 = vrot.lane.b32.xlu0 %v1138, 64
    %v1142 = vpop.permute.xlu0 %1141
    %v1144 = vmul.f32 %v1137, %v1142
    %1146 = vrot.lane.b32.xlu0 %v1144, 32
    %v1147 = vpop.permute.xlu0 %1146
    %v1149 = vadd.f32 %v1139, %v1147
    %v1150 = vtanh.pop %v1149
    %1152 = vrot.lane.b32.xlu0 %v1150, 64
    %v1153 = vpop.permute.xlu0 %1152
    %v1155 = vmul.f32 %v1137, %v1153
    %1157 = vrot.lane.b32.xlu0 %v1131, 32
    %v1158 = vpop.permute.xlu0 %1157
    %1161 = vrot.lane.b32.xlu0 %v1155, 64
    %v1162 = vpop.permute.xlu0 %1161
    %v1164 = vsel %vm238, %v1158, %v1162
    %v1166 = vsel %vm240, %v1164, 0
    %1168 = vmatprep.subr.mxu0 %v42
    %1169 = vmatpush1.msra.mxu0 %v41
    %1170 = vmatprep.subr.mxu0 %v44
    %1171 = vmatpush1.msra.mxu0 %v43
    %1172 = vmatprep.subr.mxu0 %v46
    %1173 = vmatpush1.msra.mxu0 %v45
    %1174 = vmatprep.subr.mxu0 %v48
    %1175 = vmatpush1.msra.mxu0 %v47
    %1176 = vmatprep.subr.mxu0 %v50
    %1177 = vmatpush1.msra.mxu0 %v49
    %1178 = vmatprep.subr.mxu0 %v52
    %1179 = vmatpush1.msra.mxu0 %v51
    %1180 = vmatprep.subr.mxu0 %v54
    %1181 = vmatpush1.msra.mxu0 %v53
    %1182 = vmatprep.subr.mxu0 %v56
    %1183 = vmatpush1.msra.mxu0 %v55
    %1184 = vmatprep.subr.mxu0 0.0
    %1185 = vmatpush1.msra.mxu0 0.0
    %1186 = vmatprep.subr.mxu0 0.0
    %1187 = vmatpush1.msra.mxu0 0.0
    %1188 = vmatprep.subr.mxu0 0.0
    %1189 = vmatpush1.msra.mxu0 0.0
    %1190 = vmatprep.subr.mxu0 0.0
    %1191 = vmatpush1.msra.mxu0 0.0
    %1192 = vmatprep.subr.mxu0 0.0
    %1193 = vmatpush1.msra.mxu0 0.0
    %1194 = vmatprep.subr.mxu0 0.0
    %1195 = vmatpush1.msra.mxu0 0.0
    %1196 = vmatprep.subr.mxu0 0.0
    %1197 = vmatpush1.msra.mxu0 0.0
    %1198 = vmatprep.subr.mxu0 0.0
    %1199 = vmatpush1.msra.mxu0 0.0
    %1200 = vmatprep.subr.mxu0 0.0
    %1201 = vmatpush1.msra.mxu0 0.0
    %1202 = vmatprep.subr.mxu0 0.0
    %1203 = vmatpush1.msra.mxu0 0.0
    %1204 = vmatprep.subr.mxu0 0.0
    %1205 = vmatpush1.msra.mxu0 0.0
    %1206 = vmatprep.subr.mxu0 0.0
    %1207 = vmatpush1.msra.mxu0 0.0
    %1208 = vmatprep.subr.mxu0 0.0
    %1209 = vmatpush1.msra.mxu0 0.0
    %1210 = vmatprep.subr.mxu0 0.0
    %1211 = vmatpush1.msra.mxu0 0.0
    %1212 = vmatprep.subr.mxu0 0.0
    %1213 = vmatpush1.msra.mxu0 0.0
    %1214 = vmatprep.subr.mxu0 0.0
    %1215 = vmatpush1.msra.mxu0 0.0
    %1216 = vmatprep.subr.mxu0 0.0
    %1217 = vmatpush1.msra.mxu0 0.0
    %1218 = vmatprep.subr.mxu0 0.0
    %1219 = vmatpush1.msra.mxu0 0.0
    %1220 = vmatprep.subr.mxu0 0.0
    %1221 = vmatpush1.msra.mxu0 0.0
    %1222 = vmatprep.subr.mxu0 0.0
    %1223 = vmatpush1.msra.mxu0 0.0
    %1224 = vmatprep.subr.mxu0 0.0
    %1225 = vmatpush1.msra.mxu0 0.0
    %1226 = vmatprep.subr.mxu0 0.0
    %1227 = vmatpush1.msra.mxu0 0.0
    %1228 = vmatprep.subr.mxu0 0.0
    %1229 = vmatpush1.msra.mxu0 0.0
    %1230 = vmatprep.subr.mxu0 0.0
    %1231 = vmatpush1.msra.mxu0 0.0
    %1232 = vmatprep.mubr.f32.mxu0 0.0
    %1233 = vmatmul.mubr.f32.gmra.mrb[0].mxu0 %v1166
    %v1234 = vpop.f32.mrb[0].mxu0
    %v1235 = vpop.f32.mrb[0].mxu0
    %v1236 = vadd.f32 %v205, %v1235
    %1237 = vdwg.mxu0
    %v1238 = vxor.u32 %v1236, 2147483648
    %v1239 = vmul.f32 %v1238, 1.442695
    %v1240 = vpow.pop %v1239
    %v1241 = vadd.f32 %v1240, 1.0
    %v1242 = vrcp.pop %v1241
    %v1243 = vmul.f32 1.0, %v1242
    %v1244 = vtanh.pop %v1236
    %v1245 = vmul.f32 %v1243, %v1149
    %1247 = vrot.lane.b32.xlu0 %v1244, 64
    %v1248 = vpop.permute.xlu0 %1247
    %v1250 = vmul.f32 %v1243, %v1248
    %1252 = vrot.lane.b32.xlu0 %v1250, 32
    %v1253 = vpop.permute.xlu0 %1252
    %v1255 = vadd.f32 %v1245, %v1253
    %v1256 = vtanh.pop %v1255
    %1258 = vrot.lane.b32.xlu0 %v1256, 64
    %v1259 = vpop.permute.xlu0 %1258
    %v1261 = vmul.f32 %v1243, %v1259
    %v1262 = vld [vmem:[#allocation4 + $0xb0] sm:$0xff]
    %v1263 = vld [vmem:[#allocation4 + $0xc0] sm:$0xff]
    %v1264 = vld [vmem:[#allocation4 + $0xd0] sm:$0xff]
    %v1265 = vld [vmem:[#allocation4 + $0xe0] sm:$0xff]
    %s1266 = scalar_lea.vmem [#allocation4], 240
    %v1267 = vld [vmem:[%s1266] ss:$8 sm:$0x3]
    %v1269 = vlaneseq
    %v1270 = vshrl.u32 %v1269, 7
    %v1271 = vsub.s32 0, %v1270
    %v1272 = vrot.slane %v1267, %v1271
    %1275 = vrot.lane.b32.xlu0 %v363, 32
    %v1276 = vpop.permute.xlu0 %1275
    %1277 = vrot.lane.b32.xlu0 %v495, 32
    %v1278 = vpop.permute.xlu0 %1277
    %1279 = vrot.lane.b32.xlu0 %v627, 32
    %v1280 = vpop.permute.xlu0 %1279
    %1281 = vrot.lane.b32.xlu0 %v759, 32
    %v1282 = vpop.permute.xlu0 %1281
    %1283 = vrot.lane.b32.xlu0 %v891, 32
    %v1284 = vpop.permute.xlu0 %1283
    %1285 = vrot.lane.b32.xlu0 %v1023, 32
    %v1286 = vpop.permute.xlu0 %1285
    %1287 = vrot.lane.b32.xlu0 %v1155, 32
    %v1288 = vpop.permute.xlu0 %1287
    %1289 = vrot.lane.b32.xlu0 %v1261, 32
    %v1290 = vpop.permute.xlu0 %1289
    %v1291 = vsel %vm238, %v1276, 0
    %v1293 = vsel %vm238, %v1278, 0
    %v1295 = vsel %vm238, %v1280, 0
    %v1297 = vsel %vm238, %v1282, 0
    %v1299 = vsel %vm238, %v1284, 0
    %v1301 = vsel %vm238, %v1286, 0
    %v1303 = vsel %vm238, %v1288, 0
    %v1305 = vsel %vm238, %v1290, 0
    %1307 = vmatprep.subr.mxu0 0.0
    %1308 = vmatpush1.msra.mxu0 %v1262
    %1309 = vmatprep.subr.mxu0 0.0
    %1310 = vmatpush1.msra.mxu0 %v1263
    %1311 = vmatprep.subr.mxu0 0.0
    %1312 = vmatpush1.msra.mxu0 %v1264
    %1313 = vmatprep.subr.mxu0 0.0
    %1314 = vmatpush1.msra.mxu0 %v1265
    %1315 = vmatprep.subr.mxu0 0.0
    %1316 = vmatpush1.msra.mxu0 0.0
    %1317 = vmatprep.subr.mxu0 0.0
    %1318 = vmatpush1.msra.mxu0 0.0
    %1319 = vmatprep.subr.mxu0 0.0
    %1320 = vmatpush1.msra.mxu0 0.0
    %1321 = vmatprep.subr.mxu0 0.0
    %1322 = vmatpush1.msra.mxu0 0.0
    %1323 = vmatprep.subr.mxu0 0.0
    %1324 = vmatpush1.msra.mxu0 0.0
    %1325 = vmatprep.subr.mxu0 0.0
    %1326 = vmatpush1.msra.mxu0 0.0
    %1327 = vmatprep.subr.mxu0 0.0
    %1328 = vmatpush1.msra.mxu0 0.0
    %1329 = vmatprep.subr.mxu0 0.0
    %1330 = vmatpush1.msra.mxu0 0.0
    %1331 = vmatprep.subr.mxu0 0.0
    %1332 = vmatpush1.msra.mxu0 0.0
    %1333 = vmatprep.subr.mxu0 0.0
    %1334 = vmatpush1.msra.mxu0 0.0
    %1335 = vmatprep.subr.mxu0 0.0
    %1336 = vmatpush1.msra.mxu0 0.0
    %1337 = vmatprep.subr.mxu0 0.0
    %1338 = vmatpush1.msra.mxu0 0.0
    %1339 = vmatprep.subr.mxu0 0.0
    %1340 = vmatpush1.msra.mxu0 0.0
    %1341 = vmatprep.subr.mxu0 0.0
    %1342 = vmatpush1.msra.mxu0 0.0
    %1343 = vmatprep.subr.mxu0 0.0
    %1344 = vmatpush1.msra.mxu0 0.0
    %1345 = vmatprep.subr.mxu0 0.0
    %1346 = vmatpush1.msra.mxu0 0.0
    %1347 = vmatprep.subr.mxu0 0.0
    %1348 = vmatpush1.msra.mxu0 0.0
    %1349 = vmatprep.subr.mxu0 0.0
    %1350 = vmatpush1.msra.mxu0 0.0
    %1351 = vmatprep.subr.mxu0 0.0
    %1352 = vmatpush1.msra.mxu0 0.0
    %1353 = vmatprep.subr.mxu0 0.0
    %1354 = vmatpush1.msra.mxu0 0.0
    %1355 = vmatprep.subr.mxu0 0.0
    %1356 = vmatpush1.msra.mxu0 0.0
    %1357 = vmatprep.subr.mxu0 0.0
    %1358 = vmatpush1.msra.mxu0 0.0
    %1359 = vmatprep.subr.mxu0 0.0
    %1360 = vmatpush1.msra.mxu0 0.0
    %1361 = vmatprep.subr.mxu0 0.0
    %1362 = vmatpush1.msra.mxu0 0.0
    %1363 = vmatprep.subr.mxu0 0.0
    %1364 = vmatpush1.msra.mxu0 0.0
    %1365 = vmatprep.subr.mxu0 0.0
    %1366 = vmatpush1.msra.mxu0 0.0
    %1367 = vmatprep.subr.mxu0 0.0
    %1368 = vmatpush1.msra.mxu0 0.0
    %1369 = vmatprep.subr.mxu0 0.0
    %1370 = vmatpush1.msra.mxu0 0.0
    %1371 = vmatprep.mubr.f32.mxu0 0.0
    %1372 = vmatmul.mubr.f32.gmra.mrb[0].mxu0 %v1291
    %v1373 = vpop.f32.mrb[0].mxu0
    %v1374 = vadd.f32 %v1272, %v1373
    %v1375 = vpop.f32.mrb[0].mxu0
    %1376 = vmatprep.mubr.f32.mxu0 0.0
    %1377 = vmatmul.mubr.f32.gmra.mrb[0].mxu0 %v1293
    %v1378 = vpop.f32.mrb[0].mxu0
    %v1379 = vadd.f32 %v1272, %v1378
    %v1380 = vpop.f32.mrb[0].mxu0
    %1381 = vmatprep.mubr.f32.mxu0 0.0
    %1382 = vmatmul.mubr.f32.gmra.mrb[0].mxu0 %v1295
    %v1383 = vpop.f32.mrb[0].mxu0
    %v1384 = vadd.f32 %v1272, %v1383
    %v1385 = vpop.f32.mrb[0].mxu0
    %1386 = vmatprep.mubr.f32.mxu0 0.0
    %1387 = vmatmul.mubr.f32.gmra.mrb[0].mxu0 %v1297
    %v1388 = vpop.f32.mrb[0].mxu0
    %v1389 = vadd.f32 %v1272, %v1388
    %v1390 = vpop.f32.mrb[0].mxu0
    %1391 = vmatprep.mubr.f32.mxu0 0.0
    %1392 = vmatmul.mubr.f32.gmra.mrb[0].mxu0 %v1299
    %v1393 = vpop.f32.mrb[0].mxu0
    %v1394 = vadd.f32 %v1272, %v1393
    %v1395 = vpop.f32.mrb[0].mxu0
    %1396 = vmatprep.mubr.f32.mxu0 0.0
    %1397 = vmatmul.mubr.f32.gmra.mrb[0].mxu0 %v1301
    %v1398 = vpop.f32.mrb[0].mxu0
    %v1399 = vadd.f32 %v1272, %v1398
    %v1400 = vpop.f32.mrb[0].mxu0
    %1401 = vmatprep.mubr.f32.mxu0 0.0
    %1402 = vmatmul.mubr.f32.gmra.mrb[0].mxu0 %v1303
    %v1403 = vpop.f32.mrb[0].mxu0
    %v1404 = vadd.f32 %v1272, %v1403
    %v1405 = vpop.f32.mrb[0].mxu0
    %1406 = vmatprep.mubr.f32.mxu0 0.0
    %1407 = vmatmul.mubr.f32.gmra.mrb[0].mxu0 %v1305
    %v1408 = vpop.f32.mrb[0].mxu0
    %v1409 = vadd.f32 %v1272, %v1408
    %v1410 = vpop.f32.mrb[0].mxu0
    %1411 = vdwg.mxu0
    %1412 = vst [vmem:[%s2] sm:$0xff] %v1374
    %1413 = vst [vmem:[%s2 + $0x8] sm:$0xff] %v1379
    %1414 = vst [vmem:[%s2 + $0x10] sm:$0xff] %v1384
    %1415 = vst [vmem:[%s2 + $0x18] sm:$0xff] %v1389
    %1416 = vst [vmem:[%s2 + $0x20] sm:$0xff] %v1394
    %1417 = vst [vmem:[%s2 + $0x28] sm:$0xff] %v1399
    %1418 = vst [vmem:[%s2 + $0x30] sm:$0xff] %v1404
    %1419 = vst [vmem:[%s2 + $0x38] sm:$0xff] %v1409
    // Predicated region
    $region18: #{lstm_forward.1} parent=1 // pred_check
      _
    $region19: #{lstm_forward.1} parent=1 // pred_check_branch
      %1421 = sbr.rel (0) target = $region21
    $region20: #{lstm_forward.1} parent=1 // pred_region
      _
    $region21: #{lstm_forward.1} parent=1 // pred_fallthru
      _
    // Predicated region
    $region22: #{lstm_forward.1} parent=1 // pred_check
      _
    $region23: #{lstm_forward.1} parent=1 // pred_check_branch
      %1423 = sbr.rel (0) target = $region25
    $region24: #{lstm_forward.1} parent=1 // pred_region
      _
    $region25: #{lstm_forward.1} parent=1 // pred_fallthru
      _
    %1424 = vsyncpa [#allocation3], 1
    %1425 = vsyncpa [#allocation5], 1

</llo_original>
